<compile_context>
chip_gen: v7x
topology: tpu7x:2x2x1
jax: 0.10.0
libtpu: 0.0.40
codegen_flags: <defaults>
</compile_context>

<pallas_src>
import functools

import jax
import jax.numpy as jnp
from jax.experimental import pallas as pl
from jax.experimental.pallas import tpu as pltpu

LANE = 128
SUBLANE = 8


def _round_up(n, m):
    return ((n + m - 1) // m) * m


def _pad2(a, rows, cols):
    r, c = a.shape
    return jnp.pad(a, ((0, rows - r), (0, cols - c)))


def _const_spec(rows, cols):
    """Full-block spec with a constant index_map; single-buffered if supported."""
    if hasattr(pl, "Buffered"):
        try:
            return pl.BlockSpec((rows, cols), lambda i, j: (0, 0),
                                pipeline_mode=pl.Buffered(buffer_count=1))
        except Exception:  # older jax: no pipeline_mode kwarg
            pass
    return pl.BlockSpec((rows, cols), lambda i, j: (0, 0))


# ----------------------------------------------------------------------------
# Fused kernel: grid = (batch_tiles, 3 head-column tiles)
# ----------------------------------------------------------------------------
def _fused_zinb_ae_kernel(
    x_ref,
    w1, b1, w2, b2, w3, b3, w4, b4,          # encoder (Linear+ReLU) x4
    w5, b5, w6, b6, w7, b7, w8, b8,          # decoder (Linear+ReLU) x4
    wh, bh,                                  # head column tile (dp, dp) / (1, dp)
    s_ref,                                   # per-row scale factor (TB, 1)
    o_ref, pi_ref, disp_ref, mean_ref, emb_ref,
    latent_ref,                              # VMEM scratch: cached decoder output
    *, mxu_dtype,
):
    j = pl.program_id(1)

    def linear_relu(h, w_ref, b_ref):
        y = jnp.dot(h.astype(mxu_dtype), w_ref[...],
                    preferred_element_type=jnp.float32)
        return jnp.maximum(y + b_ref[...], 0.0)

    # j == 0: run encoder + decoder once per batch tile, cache latent in VMEM.
    @pl.when(j == 0)
    def _():
        h = x_ref[...]                       # already mxu_dtype (cast on host)
        for w_ref, b_ref in ((w1, b1), (w2, b2), (w3, b3), (w4, b4)):
            h = linear_relu(h, w_ref, b_ref)
        emb_ref[...] = h.astype(emb_ref.dtype)
        for w_ref, b_ref in ((w5, b5), (w6, b6), (w7, b7), (w8, b8)):
            h = linear_relu(h, w_ref, b_ref)
        latent_ref[...] = h.astype(latent_ref.dtype)

    # One head column tile per j: j=0 -> pi, j=1 -> disp, j=2 -> mean (+ o).
    head = jnp.dot(latent_ref[...], wh[...],
                   preferred_element_type=jnp.float32) + bh[...]

    @pl.when(j == 0)
    def _():
        # Sigmoid in Sequential + sigmoid in forward (module applies it twice).
        pi_ref[...] = jax.nn.sigmoid(jax.nn.sigmoid(head)).astype(pi_ref.dtype)

    @pl.when(j == 1)
    def _():
        disp_ref[...] = jnp.clip(head, 0.0001, 10000.0).astype(disp_ref.dtype)

    @pl.when(j == 2)
    def _():
        mean = jnp.clip(jnp.exp(head), 1e-05, 1000000.0)
        mean_ref[...] = mean.astype(mean_ref.dtype)
        o_ref[...] = (mean * s_ref[...]).astype(o_ref.dtype)


# ----------------------------------------------------------------------------
# One-time parameter prep: pad, cast, concatenate heads (off the hot path)
# ----------------------------------------------------------------------------
def prepare_params(params, *, use_bf16=True):
    mxu_dtype = jnp.bfloat16 if use_bf16 else jnp.float32
    d = params["pi"][0].shape[0]
    z = params["enc"][-1][0].shape[1]
    dp = _round_up(d, LANE)
    zp = _round_up(z, LANE)

    def pad_layer(w, b):
        din, dout = w.shape
        wpad = _pad2(w, _round_up(din, LANE), _round_up(dout, LANE)).astype(mxu_dtype)
        bpad = _pad2(b, 1, _round_up(dout, LANE)).astype(jnp.float32)
        return wpad, bpad

    enc = [pad_layer(w, b) for (w, b) in params["enc"]]
    dec = [pad_layer(w, b) for (w, b) in params["dec"]]

    wpi, bpi = params["pi"]
    wd, bd = params["disp"]
    wm, bm = params["mean"]
    # Column order matches the j grid axis: [pi | disp | mean].
    wh = jnp.concatenate(
        [_pad2(wpi, dp, dp), _pad2(wd, dp, dp), _pad2(wm, dp, dp)], axis=1
    ).astype(mxu_dtype)
    bh = jnp.concatenate(
        [_pad2(bpi, 1, dp), _pad2(bd, 1, dp), _pad2(bm, 1, dp)], axis=1
    ).astype(jnp.float32)

    return dict(enc=enc, dec=dec, wh=wh, bh=bh,
                d=d, z=z, dp=dp, zp=zp, mxu_dtype=mxu_dtype)


# ----------------------------------------------------------------------------
# Forward wrapper: pad batch, build grid, slice results
# ----------------------------------------------------------------------------
def pretrain_zinb_ae_forward(prepped, x, d_s, *, batch_tile=256):
    """Equivalent of pretrain_ZINB_AE.forward(d, d_s) -> (o, pi, disp, mean, z)."""
    n = x.shape[0]
    d, z, dp, zp = prepped["d"], prepped["z"], prepped["dp"], prepped["zp"]
    mxu_dtype = prepped["mxu_dtype"]
    enc, dec, wh, bh = prepped["enc"], prepped["dec"], prepped["wh"], prepped["bh"]

    np_ = _round_up(n, SUBLANE)
    tb = min(batch_tile, np_)
    np_ = _round_up(np_, tb)

    xp = _pad2(x, np_, dp).astype(mxu_dtype)        # bf16 input halves the DMA
    sp = jnp.pad(d_s.reshape(-1, 1).astype(jnp.float32), ((0, np_ - n), (0, 0)))

    grid = (np_ // tb, 3)                            # (batch tiles, head cols)

    def row_spec(cols):
        return pl.BlockSpec((tb, cols), lambda i, j: (i, 0))

    in_arrays = [xp]
    in_specs = [row_spec(dp)]
    for w, b in enc + dec:
        in_arrays += [w, b]
        in_specs += [_const_spec(*w.shape), _const_spec(*b.shape)]
    in_arrays += [wh, bh, sp]
    in_specs += [
        pl.BlockSpec((dp, dp), lambda i, j: (0, j)),   # head weight column tile
        pl.BlockSpec((1, dp), lambda i, j: (0, j)),    # head bias column tile
        row_spec(1),
    ]

    out_shape = (
        jax.ShapeDtypeStruct((np_, dp), jnp.float32),   # o
        jax.ShapeDtypeStruct((np_, dp), jnp.float32),   # pi
        jax.ShapeDtypeStruct((np_, dp), jnp.float32),   # disp
        jax.ShapeDtypeStruct((np_, dp), jnp.float32),   # mean
        jax.ShapeDtypeStruct((np_, zp), jnp.float32),   # emb
    )
    out_specs = (row_spec(dp), row_spec(dp), row_spec(dp), row_spec(dp), row_spec(zp))

    # VMEM budget: weights single-buffered, head tile + I/O double-buffered.
    w_item = jnp.dtype(mxu_dtype).itemsize
    weight_bytes = sum(int(w.size) * w_item + int(b.size) * 4 for w, b in enc + dec)
    head_bytes = 2 * (dp * dp * w_item + dp * 4)
    io_bytes = 2 * (tb * dp * w_item + tb * 4) + 2 * (4 * tb * dp * 4 + tb * zp * 4)
    scratch_bytes = tb * dp * w_item
    vmem_needed = weight_bytes + head_bytes + io_bytes + scratch_bytes
    vmem_limit = int(min(64 * 2**20, max(32 * 2**20, 2 * vmem_needed)))

    matmul_flops = 2 * np_ * (
        sum(int(w.shape[0]) * int(w.shape[1]) for w, _ in enc + dec) + dp * 3 * dp)
    bytes_in = sum(int(a.size) * a.dtype.itemsize for a in in_arrays)
    bytes_out = 4 * np_ * (4 * dp + zp)
    cost = pl.CostEstimate(
        flops=int(matmul_flops),
        transcendentals=int(5 * np_ * dp),      # 2x sigmoid (pi) + exp (mean)
        bytes_accessed=int(bytes_in + bytes_out),
    )

    kernel = functools.partial(_fused_zinb_ae_kernel, mxu_dtype=mxu_dtype)

    o, pi, disp, mean, emb = pl.pallas_call(
        kernel,
        out_shape=out_shape,
        grid=grid,
        in_specs=in_specs,
        out_specs=out_specs,
        scratch_shapes=[pltpu.VMEM((tb, dp), mxu_dtype)],   # cached decoder output
        compiler_params=pltpu.CompilerParams(
            dimension_semantics=("parallel", "arbitrary"),
            vmem_limit_bytes=vmem_limit),
        cost_estimate=cost,
    )(*in_arrays)

    return (o[:n, :d], pi[:n, :d], disp[:n, :d], mean[:n, :d], emb[:n, :z])


# ----------------------------------------------------------------------------
# Pure-JAX reference (for correctness check)
# ----------------------------------------------------------------------------
def _reference_forward(params, x, d_s):
    hp = jax.lax.Precision.HIGHEST
    h = x
    for w, b in params["enc"]:
        h = jnp.maximum(jnp.dot(h, w, precision=hp) + b, 0.0)
    emb = h
    for w, b in params["dec"]:
        h = jnp.maximum(jnp.dot(h, w, precision=hp) + b, 0.0)
    wpi, bpi = params["pi"]
    wd, bd = params["disp"]
    wm, bm = params["mean"]
    pi = jax.nn.sigmoid(jax.nn.sigmoid(jnp.dot(h, wpi, precision=hp) + bpi))
    disp = jnp.clip(jnp.dot(h, wd, precision=hp) + bd, 0.0001, 10000.0)
    mean = jnp.clip(jnp.exp(jnp.dot(h, wm, precision=hp) + bm), 1e-05, 1000000.0)
    o = mean * d_s.reshape(-1, 1)
    return o, pi, disp, mean, emb


# ----------------------------------------------------------------------------
# Parameter init (deterministic, synthetic — no checkpoint load)
# ----------------------------------------------------------------------------
def init_linear(key, din, dout):
    kw, kb = jax.random.split(key)
    bound = 1.0 / jnp.sqrt(din)
    w = jax.random.uniform(kw, (din, dout), jnp.float32, -bound, bound)
    b = jax.random.uniform(kb, (1, dout), jnp.float32, -bound, bound)
    return w, b


def init_params(key, d, h1, h2, h3, z):
    dims_enc = [(d, h1), (h1, h2), (h2, h3), (h3, z)]
    dims_dec = [(z, h3), (h3, h2), (h2, h1), (h1, d)]
    keys = jax.random.split(key, len(dims_enc) + len(dims_dec) + 3)
    params = {}
    params["enc"] = [init_linear(k, di, do) for k, (di, do) in zip(keys[:4], dims_enc)]
    params["dec"] = [init_linear(k, di, do) for k, (di, do) in zip(keys[4:8], dims_dec)]
    params["pi"] = init_linear(keys[8], d, d)
    params["disp"] = init_linear(keys[9], d, d)
    params["mean"] = init_linear(keys[10], d, d)
    return params


# ----------------------------------------------------------------------------
# Demo
# ----------------------------------------------------------------------------
if __name__ == "__main__":
    batch = 8
    d = 32                      # in_dim (gene dimension)
    h1, h2, h3, zdim = 64, 32, 16, 8

    key = jax.random.PRNGKey(0)
    kx, ks, kp = jax.random.split(key, 3)

    x = jax.random.uniform(kx, (batch, d), jnp.float32)            # count-like input
    d_s = jax.random.uniform(ks, (batch,), jnp.float32, 0.5, 2.0)  # scale factors

    params = init_params(kp, d, h1, h2, h3, zdim)
    prepped = prepare_params(params, use_bf16=True)   # one-time weight prep

    outs = pretrain_zinb_ae_forward(prepped, x, d_s)
    jax.block_until_ready(outs)
    o, pi, disp, mean, z = outs

    assert o.shape == (batch, d) and pi.shape == (batch, d)
    assert disp.shape == (batch, d) and mean.shape == (batch, d)
    assert z.shape == (batch, zdim)

    refs = _reference_forward(params, x, d_s)
    for got, want in zip(outs, refs):
        assert jnp.allclose(got, want, rtol=5e-2, atol=1e-2), "mismatch vs jnp reference"

    print("KERNEL_OK")
</pallas_src>

<mosaic_0001>
module attributes {stable_mosaic.version = 11 : i64} {
  func.func @_fused_zinb_ae_kernel(%arg0: i32, %arg1: i32, %arg2: memref<8x128xbf16, #tpu.memory_space<vmem>>, %arg3: memref<128x128xbf16, #tpu.memory_space<vmem>>, %arg4: memref<1x128xf32, #tpu.memory_space<vmem>>, %arg5: memref<128x128xbf16, #tpu.memory_space<vmem>>, %arg6: memref<1x128xf32, #tpu.memory_space<vmem>>, %arg7: memref<128x128xbf16, #tpu.memory_space<vmem>>, %arg8: memref<1x128xf32, #tpu.memory_space<vmem>>, %arg9: memref<128x128xbf16, #tpu.memory_space<vmem>>, %arg10: memref<1x128xf32, #tpu.memory_space<vmem>>, %arg11: memref<128x128xbf16, #tpu.memory_space<vmem>>, %arg12: memref<1x128xf32, #tpu.memory_space<vmem>>, %arg13: memref<128x128xbf16, #tpu.memory_space<vmem>>, %arg14: memref<1x128xf32, #tpu.memory_space<vmem>>, %arg15: memref<128x128xbf16, #tpu.memory_space<vmem>>, %arg16: memref<1x128xf32, #tpu.memory_space<vmem>>, %arg17: memref<128x128xbf16, #tpu.memory_space<vmem>>, %arg18: memref<1x128xf32, #tpu.memory_space<vmem>>, %arg19: memref<128x128xbf16, #tpu.memory_space<vmem>>, %arg20: memref<1x128xf32, #tpu.memory_space<vmem>>, %arg21: memref<8x1xf32, #tpu.memory_space<vmem>>, %arg22: memref<8x128xf32, #tpu.memory_space<vmem>>, %arg23: memref<8x128xf32, #tpu.memory_space<vmem>>, %arg24: memref<8x128xf32, #tpu.memory_space<vmem>>, %arg25: memref<8x128xf32, #tpu.memory_space<vmem>>, %arg26: memref<8x128xf32, #tpu.memory_space<vmem>>, %arg27: memref<8x128xbf16, #tpu.memory_space<vmem>>) attributes {dimension_semantics = [#tpu.dimension_semantics<parallel>, #tpu.dimension_semantics<arbitrary>], iteration_bounds = array<i64: 1, 3>, scalar_prefetch = 0 : i64, scratch_operands = 1 : i64, tpu.core_type = #tpu.core_type<tc>, window_params = [{transform_indices = @transform_0, window_bounds = array<i64: 8, 128>}, {pipeline_mode = #tpu.pipeline_mode<synchronous>, transform_indices = @transform_1, window_bounds = array<i64: 128, 128>}, {pipeline_mode = #tpu.pipeline_mode<synchronous>, transform_indices = @transform_2, window_bounds = array<i64: 1, 128>}, {pipeline_mode = #tpu.pipeline_mode<synchronous>, transform_indices = @transform_3, window_bounds = array<i64: 128, 128>}, {pipeline_mode = #tpu.pipeline_mode<synchronous>, transform_indices = @transform_4, window_bounds = array<i64: 1, 128>}, {pipeline_mode = #tpu.pipeline_mode<synchronous>, transform_indices = @transform_5, window_bounds = array<i64: 128, 128>}, {pipeline_mode = #tpu.pipeline_mode<synchronous>, transform_indices = @transform_6, window_bounds = array<i64: 1, 128>}, {pipeline_mode = #tpu.pipeline_mode<synchronous>, transform_indices = @transform_7, window_bounds = array<i64: 128, 128>}, {pipeline_mode = #tpu.pipeline_mode<synchronous>, transform_indices = @transform_8, window_bounds = array<i64: 1, 128>}, {pipeline_mode = #tpu.pipeline_mode<synchronous>, transform_indices = @transform_9, window_bounds = array<i64: 128, 128>}, {pipeline_mode = #tpu.pipeline_mode<synchronous>, transform_indices = @transform_10, window_bounds = array<i64: 1, 128>}, {pipeline_mode = #tpu.pipeline_mode<synchronous>, transform_indices = @transform_11, window_bounds = array<i64: 128, 128>}, {pipeline_mode = #tpu.pipeline_mode<synchronous>, transform_indices = @transform_12, window_bounds = array<i64: 1, 128>}, {pipeline_mode = #tpu.pipeline_mode<synchronous>, transform_indices = @transform_13, window_bounds = array<i64: 128, 128>}, {pipeline_mode = #tpu.pipeline_mode<synchronous>, transform_indices = @transform_14, window_bounds = array<i64: 1, 128>}, {pipeline_mode = #tpu.pipeline_mode<synchronous>, transform_indices = @transform_15, window_bounds = array<i64: 128, 128>}, {pipeline_mode = #tpu.pipeline_mode<synchronous>, transform_indices = @transform_16, window_bounds = array<i64: 1, 128>}, {transform_indices = @transform_17, window_bounds = array<i64: 128, 128>}, {transform_indices = @transform_18, window_bounds = array<i64: 1, 128>}, {transform_indices = @transform_19, window_bounds = array<i64: 8, 1>}, {transform_indices = @transform_20, window_bounds = array<i64: 8, 128>}, {transform_indices = @transform_21, window_bounds = array<i64: 8, 128>}, {transform_indices = @transform_22, window_bounds = array<i64: 8, 128>}, {transform_indices = @transform_23, window_bounds = array<i64: 8, 128>}, {transform_indices = @transform_24, window_bounds = array<i64: 8, 128>}]} {
    %c0_i32 = arith.constant 0 : i32
    %0 = arith.cmpi eq, %arg1, %c0_i32 : i32
    %1 = arith.extui %0 : i1 to i32
    %c0_i32_0 = arith.constant 0 : i32
    %2 = arith.cmpi ne, %1, %c0_i32_0 : i32
    scf.if %2 {
      %c0_10 = arith.constant 0 : index
      %c0_11 = arith.constant 0 : index
      %18 = vector.load %arg2[%c0_10, %c0_11] : memref<8x128xbf16, #tpu.memory_space<vmem>>, vector<8x128xbf16>
      %c0_12 = arith.constant 0 : index
      %c0_13 = arith.constant 0 : index
      %19 = vector.load %arg3[%c0_12, %c0_13] : memref<128x128xbf16, #tpu.memory_space<vmem>>, vector<128x128xbf16>
      %cst_14 = arith.constant dense<0.000000e+00> : vector<8x128xf32>
      %20 = tpu.matmul %18, %19, %cst_14 {dimension_numbers = #tpu.dot_dimension_numbers<[1], [0], [0], [1], [0, 0, 1, 1], [], []>} : vector<8x128xbf16>, vector<128x128xbf16>, vector<8x128xf32> -> vector<8x128xf32>
      %c0_15 = arith.constant 0 : index
      %c0_16 = arith.constant 0 : index
      %21 = vector.load %arg4[%c0_15, %c0_16] : memref<1x128xf32, #tpu.memory_space<vmem>>, vector<1x128xf32>
      %22 = vector.broadcast %21 : vector<1x128xf32> to vector<8x128xf32>
      %23 = arith.addf %20, %22 : vector<8x128xf32>
      %cst_17 = arith.constant 0.000000e+00 : f32
      %24 = vector.broadcast %cst_17 : f32 to vector<8x128xf32>
      %25 = arith.maximumf %23, %24 : vector<8x128xf32>
      %26 = arith.truncf %25 : vector<8x128xf32> to vector<8x128xbf16>
      %c0_18 = arith.constant 0 : index
      %c0_19 = arith.constant 0 : index
      %27 = vector.load %arg5[%c0_18, %c0_19] : memref<128x128xbf16, #tpu.memory_space<vmem>>, vector<128x128xbf16>
      %cst_20 = arith.constant dense<0.000000e+00> : vector<8x128xf32>
      %28 = tpu.matmul %26, %27, %cst_20 {dimension_numbers = #tpu.dot_dimension_numbers<[1], [0], [0], [1], [0, 0, 1, 1], [], []>} : vector<8x128xbf16>, vector<128x128xbf16>, vector<8x128xf32> -> vector<8x128xf32>
      %c0_21 = arith.constant 0 : index
      %c0_22 = arith.constant 0 : index
      %29 = vector.load %arg6[%c0_21, %c0_22] : memref<1x128xf32, #tpu.memory_space<vmem>>, vector<1x128xf32>
      %30 = vector.broadcast %29 : vector<1x128xf32> to vector<8x128xf32>
      %31 = arith.addf %28, %30 : vector<8x128xf32>
      %cst_23 = arith.constant 0.000000e+00 : f32
      %32 = vector.broadcast %cst_23 : f32 to vector<8x128xf32>
      %33 = arith.maximumf %31, %32 : vector<8x128xf32>
      %34 = arith.truncf %33 : vector<8x128xf32> to vector<8x128xbf16>
      %c0_24 = arith.constant 0 : index
      %c0_25 = arith.constant 0 : index
      %35 = vector.load %arg7[%c0_24, %c0_25] : memref<128x128xbf16, #tpu.memory_space<vmem>>, vector<128x128xbf16>
      %cst_26 = arith.constant dense<0.000000e+00> : vector<8x128xf32>
      %36 = tpu.matmul %34, %35, %cst_26 {dimension_numbers = #tpu.dot_dimension_numbers<[1], [0], [0], [1], [0, 0, 1, 1], [], []>} : vector<8x128xbf16>, vector<128x128xbf16>, vector<8x128xf32> -> vector<8x128xf32>
      %c0_27 = arith.constant 0 : index
      %c0_28 = arith.constant 0 : index
      %37 = vector.load %arg8[%c0_27, %c0_28] : memref<1x128xf32, #tpu.memory_space<vmem>>, vector<1x128xf32>
      %38 = vector.broadcast %37 : vector<1x128xf32> to vector<8x128xf32>
      %39 = arith.addf %36, %38 : vector<8x128xf32>
      %cst_29 = arith.constant 0.000000e+00 : f32
      %40 = vector.broadcast %cst_29 : f32 to vector<8x128xf32>
      %41 = arith.maximumf %39, %40 : vector<8x128xf32>
      %42 = arith.truncf %41 : vector<8x128xf32> to vector<8x128xbf16>
      %c0_30 = arith.constant 0 : index
      %c0_31 = arith.constant 0 : index
      %43 = vector.load %arg9[%c0_30, %c0_31] : memref<128x128xbf16, #tpu.memory_space<vmem>>, vector<128x128xbf16>
      %cst_32 = arith.constant dense<0.000000e+00> : vector<8x128xf32>
      %44 = tpu.matmul %42, %43, %cst_32 {dimension_numbers = #tpu.dot_dimension_numbers<[1], [0], [0], [1], [0, 0, 1, 1], [], []>} : vector<8x128xbf16>, vector<128x128xbf16>, vector<8x128xf32> -> vector<8x128xf32>
      %c0_33 = arith.constant 0 : index
      %c0_34 = arith.constant 0 : index
      %45 = vector.load %arg10[%c0_33, %c0_34] : memref<1x128xf32, #tpu.memory_space<vmem>>, vector<1x128xf32>
      %46 = vector.broadcast %45 : vector<1x128xf32> to vector<8x128xf32>
      %47 = arith.addf %44, %46 : vector<8x128xf32>
      %cst_35 = arith.constant 0.000000e+00 : f32
      %48 = vector.broadcast %cst_35 : f32 to vector<8x128xf32>
      %49 = arith.maximumf %47, %48 : vector<8x128xf32>
      %c0_36 = arith.constant 0 : index
      %c0_37 = arith.constant 0 : index
      %50 = vector.load %arg26[%c0_36, %c0_37] : memref<8x128xf32, #tpu.memory_space<vmem>>, vector<8x128xf32>
      tpu.vector_store %arg26[%c0_36, %c0_37], %49 {strides = array<i32>} : memref<8x128xf32, #tpu.memory_space<vmem>>, vector<8x128xf32>,
      %51 = arith.truncf %49 : vector<8x128xf32> to vector<8x128xbf16>
      %c0_38 = arith.constant 0 : index
      %c0_39 = arith.constant 0 : index
      %52 = vector.load %arg11[%c0_38, %c0_39] : memref<128x128xbf16, #tpu.memory_space<vmem>>, vector<128x128xbf16>
      %cst_40 = arith.constant dense<0.000000e+00> : vector<8x128xf32>
      %53 = tpu.matmul %51, %52, %cst_40 {dimension_numbers = #tpu.dot_dimension_numbers<[1], [0], [0], [1], [0, 0, 1, 1], [], []>} : vector<8x128xbf16>, vector<128x128xbf16>, vector<8x128xf32> -> vector<8x128xf32>
      %c0_41 = arith.constant 0 : index
      %c0_42 = arith.constant 0 : index
      %54 = vector.load %arg12[%c0_41, %c0_42] : memref<1x128xf32, #tpu.memory_space<vmem>>, vector<1x128xf32>
      %55 = vector.broadcast %54 : vector<1x128xf32> to vector<8x128xf32>
      %56 = arith.addf %53, %55 : vector<8x128xf32>
      %cst_43 = arith.constant 0.000000e+00 : f32
      %57 = vector.broadcast %cst_43 : f32 to vector<8x128xf32>
      %58 = arith.maximumf %56, %57 : vector<8x128xf32>
      %59 = arith.truncf %58 : vector<8x128xf32> to vector<8x128xbf16>
      %c0_44 = arith.constant 0 : index
      %c0_45 = arith.constant 0 : index
      %60 = vector.load %arg13[%c0_44, %c0_45] : memref<128x128xbf16, #tpu.memory_space<vmem>>, vector<128x128xbf16>
      %cst_46 = arith.constant dense<0.000000e+00> : vector<8x128xf32>
      %61 = tpu.matmul %59, %60, %cst_46 {dimension_numbers = #tpu.dot_dimension_numbers<[1], [0], [0], [1], [0, 0, 1, 1], [], []>} : vector<8x128xbf16>, vector<128x128xbf16>, vector<8x128xf32> -> vector<8x128xf32>
      %c0_47 = arith.constant 0 : index
      %c0_48 = arith.constant 0 : index
      %62 = vector.load %arg14[%c0_47, %c0_48] : memref<1x128xf32, #tpu.memory_space<vmem>>, vector<1x128xf32>
      %63 = vector.broadcast %62 : vector<1x128xf32> to vector<8x128xf32>
      %64 = arith.addf %61, %63 : vector<8x128xf32>
      %cst_49 = arith.constant 0.000000e+00 : f32
      %65 = vector.broadcast %cst_49 : f32 to vector<8x128xf32>
      %66 = arith.maximumf %64, %65 : vector<8x128xf32>
      %67 = arith.truncf %66 : vector<8x128xf32> to vector<8x128xbf16>
      %c0_50 = arith.constant 0 : index
      %c0_51 = arith.constant 0 : index
      %68 = vector.load %arg15[%c0_50, %c0_51] : memref<128x128xbf16, #tpu.memory_space<vmem>>, vector<128x128xbf16>
      %cst_52 = arith.constant dense<0.000000e+00> : vector<8x128xf32>
      %69 = tpu.matmul %67, %68, %cst_52 {dimension_numbers = #tpu.dot_dimension_numbers<[1], [0], [0], [1], [0, 0, 1, 1], [], []>} : vector<8x128xbf16>, vector<128x128xbf16>, vector<8x128xf32> -> vector<8x128xf32>
      %c0_53 = arith.constant 0 : index
      %c0_54 = arith.constant 0 : index
      %70 = vector.load %arg16[%c0_53, %c0_54] : memref<1x128xf32, #tpu.memory_space<vmem>>, vector<1x128xf32>
      %71 = vector.broadcast %70 : vector<1x128xf32> to vector<8x128xf32>
      %72 = arith.addf %69, %71 : vector<8x128xf32>
      %cst_55 = arith.constant 0.000000e+00 : f32
      %73 = vector.broadcast %cst_55 : f32 to vector<8x128xf32>
      %74 = arith.maximumf %72, %73 : vector<8x128xf32>
      %75 = arith.truncf %74 : vector<8x128xf32> to vector<8x128xbf16>
      %c0_56 = arith.constant 0 : index
      %c0_57 = arith.constant 0 : index
      %76 = vector.load %arg17[%c0_56, %c0_57] : memref<128x128xbf16, #tpu.memory_space<vmem>>, vector<128x128xbf16>
      %cst_58 = arith.constant dense<0.000000e+00> : vector<8x128xf32>
      %77 = tpu.matmul %75, %76, %cst_58 {dimension_numbers = #tpu.dot_dimension_numbers<[1], [0], [0], [1], [0, 0, 1, 1], [], []>} : vector<8x128xbf16>, vector<128x128xbf16>, vector<8x128xf32> -> vector<8x128xf32>
      %c0_59 = arith.constant 0 : index
      %c0_60 = arith.constant 0 : index
      %78 = vector.load %arg18[%c0_59, %c0_60] : memref<1x128xf32, #tpu.memory_space<vmem>>, vector<1x128xf32>
      %79 = vector.broadcast %78 : vector<1x128xf32> to vector<8x128xf32>
      %80 = arith.addf %77, %79 : vector<8x128xf32>
      %cst_61 = arith.constant 0.000000e+00 : f32
      %81 = vector.broadcast %cst_61 : f32 to vector<8x128xf32>
      %82 = arith.maximumf %80, %81 : vector<8x128xf32>
      %83 = arith.truncf %82 : vector<8x128xf32> to vector<8x128xbf16>
      %c0_62 = arith.constant 0 : index
      %c0_63 = arith.constant 0 : index
      %84 = vector.load %arg27[%c0_62, %c0_63] : memref<8x128xbf16, #tpu.memory_space<vmem>>, vector<8x128xbf16>
      tpu.vector_store %arg27[%c0_62, %c0_63], %83 {strides = array<i32>} : memref<8x128xbf16, #tpu.memory_space<vmem>>, vector<8x128xbf16>,
    } else {
    }
    %c0 = arith.constant 0 : index
    %c0_1 = arith.constant 0 : index
    %3 = vector.load %arg27[%c0, %c0_1] : memref<8x128xbf16, #tpu.memory_space<vmem>>, vector<8x128xbf16>
    %c0_2 = arith.constant 0 : index
    %c0_3 = arith.constant 0 : index
    %4 = vector.load %arg19[%c0_2, %c0_3] : memref<128x128xbf16, #tpu.memory_space<vmem>>, vector<128x128xbf16>
    %cst = arith.constant dense<0.000000e+00> : vector<8x128xf32>
    %5 = tpu.matmul %3, %4, %cst {dimension_numbers = #tpu.dot_dimension_numbers<[1], [0], [0], [1], [0, 0, 1, 1], [], []>} : vector<8x128xbf16>, vector<128x128xbf16>, vector<8x128xf32> -> vector<8x128xf32>
    %c0_4 = arith.constant 0 : index
    %c0_5 = arith.constant 0 : index
    %6 = vector.load %arg20[%c0_4, %c0_5] : memref<1x128xf32, #tpu.memory_space<vmem>>, vector<1x128xf32>
    %7 = vector.broadcast %6 : vector<1x128xf32> to vector<8x128xf32>
    %8 = arith.addf %5, %7 : vector<8x128xf32>
    %c0_i32_6 = arith.constant 0 : i32
    %9 = arith.cmpi eq, %arg1, %c0_i32_6 : i32
    %10 = arith.extui %9 : i1 to i32
    %c0_i32_7 = arith.constant 0 : i32
    %11 = arith.cmpi ne, %10, %c0_i32_7 : i32
    scf.if %11 {
      %18 = arith.negf %8 : vector<8x128xf32>
      %19 = math.exp %18 : vector<8x128xf32>
      %cst_10 = arith.constant 1.000000e+00 : f32
      %20 = vector.broadcast %cst_10 : f32 to vector<8x128xf32>
      %21 = arith.addf %20, %19 : vector<8x128xf32>
      %22 = arith.divf %20, %21 : vector<8x128xf32>
      %23 = arith.negf %22 : vector<8x128xf32>
      %24 = math.exp %23 : vector<8x128xf32>
      %cst_11 = arith.constant 1.000000e+00 : f32
      %25 = vector.broadcast %cst_11 : f32 to vector<8x128xf32>
      %26 = arith.addf %25, %24 : vector<8x128xf32>
      %27 = arith.divf %25, %26 : vector<8x128xf32>
      %c0_12 = arith.constant 0 : index
      %c0_13 = arith.constant 0 : index
      %28 = vector.load %arg23[%c0_12, %c0_13] : memref<8x128xf32, #tpu.memory_space<vmem>>, vector<8x128xf32>
      tpu.vector_store %arg23[%c0_12, %c0_13], %27 {strides = array<i32>} : memref<8x128xf32, #tpu.memory_space<vmem>>, vector<8x128xf32>,
    } else {
    }
    %c1_i32 = arith.constant 1 : i32
    %12 = arith.cmpi eq, %arg1, %c1_i32 : i32
    %13 = arith.extui %12 : i1 to i32
    %c0_i32_8 = arith.constant 0 : i32
    %14 = arith.cmpi ne, %13, %c0_i32_8 : i32
    scf.if %14 {
      %cst_10 = arith.constant 9.99999974E-5 : f32
      %cst_11 = arith.constant 1.000000e+04 : f32
      %18 = vector.broadcast %cst_10 : f32 to vector<8x128xf32>
      %19 = arith.maximumf %18, %8 : vector<8x128xf32>
      %20 = vector.broadcast %cst_11 : f32 to vector<8x128xf32>
      %21 = arith.minimumf %20, %19 : vector<8x128xf32>
      %c0_12 = arith.constant 0 : index
      %c0_13 = arith.constant 0 : index
      %22 = vector.load %arg24[%c0_12, %c0_13] : memref<8x128xf32, #tpu.memory_space<vmem>>, vector<8x128xf32>
      tpu.vector_store %arg24[%c0_12, %c0_13], %21 {strides = array<i32>} : memref<8x128xf32, #tpu.memory_space<vmem>>, vector<8x128xf32>,
    } else {
    }
    %c2_i32 = arith.constant 2 : i32
    %15 = arith.cmpi eq, %arg1, %c2_i32 : i32
    %16 = arith.extui %15 : i1 to i32
    %c0_i32_9 = arith.constant 0 : i32
    %17 = arith.cmpi ne, %16, %c0_i32_9 : i32
    scf.if %17 {
      %18 = math.exp %8 : vector<8x128xf32>
      %cst_10 = arith.constant 9.99999974E-6 : f32
      %cst_11 = arith.constant 1.000000e+06 : f32
      %19 = vector.broadcast %cst_10 : f32 to vector<8x128xf32>
      %20 = arith.maximumf %19, %18 : vector<8x128xf32>
      %21 = vector.broadcast %cst_11 : f32 to vector<8x128xf32>
      %22 = arith.minimumf %21, %20 : vector<8x128xf32>
      %c0_12 = arith.constant 0 : index
      %c0_13 = arith.constant 0 : index
      %23 = vector.load %arg25[%c0_12, %c0_13] : memref<8x128xf32, #tpu.memory_space<vmem>>, vector<8x128xf32>
      tpu.vector_store %arg25[%c0_12, %c0_13], %22 {strides = array<i32>} : memref<8x128xf32, #tpu.memory_space<vmem>>, vector<8x128xf32>,
      %c0_14 = arith.constant 0 : index
      %c0_15 = arith.constant 0 : index
      %24 = vector.load %arg21[%c0_14, %c0_15] : memref<8x1xf32, #tpu.memory_space<vmem>>, vector<8x1xf32>
      %25 = vector.broadcast %24 : vector<8x1xf32> to vector<8x128xf32>
      %26 = arith.mulf %22, %25 : vector<8x128xf32>
      %c0_16 = arith.constant 0 : index
      %c0_17 = arith.constant 0 : index
      %27 = vector.load %arg22[%c0_16, %c0_17] : memref<8x128xf32, #tpu.memory_space<vmem>>, vector<8x128xf32>
      tpu.vector_store %arg22[%c0_16, %c0_17], %26 {strides = array<i32>} : memref<8x128xf32, #tpu.memory_space<vmem>>, vector<8x128xf32>,
    } else {
    }
    return
  }
  func.func @transform_0(%arg0: i32, %arg1: i32) -> (i32, i32) {
    %c0_i32 = arith.constant 0 : i32
    %c0_i32_0 = arith.constant 0 : i32
    return %arg0, %c0_i32 : i32, i32
  }
  func.func @transform_1(%arg0: i32, %arg1: i32) -> (i32, i32) {
    %c0_i32 = arith.constant 0 : i32
    %c0_i32_0 = arith.constant 0 : i32
    %c0_i32_1 = arith.constant 0 : i32
    return %c0_i32, %c0_i32_0 : i32, i32
  }
  func.func @transform_2(%arg0: i32, %arg1: i32) -> (i32, i32) {
    %c0_i32 = arith.constant 0 : i32
    %c0_i32_0 = arith.constant 0 : i32
    %c0_i32_1 = arith.constant 0 : i32
    return %c0_i32, %c0_i32_0 : i32, i32
  }
  func.func @transform_3(%arg0: i32, %arg1: i32) -> (i32, i32) {
    %c0_i32 = arith.constant 0 : i32
    %c0_i32_0 = arith.constant 0 : i32
    %c0_i32_1 = arith.constant 0 : i32
    return %c0_i32, %c0_i32_0 : i32, i32
  }
  func.func @transform_4(%arg0: i32, %arg1: i32) -> (i32, i32) {
    %c0_i32 = arith.constant 0 : i32
    %c0_i32_0 = arith.constant 0 : i32
    %c0_i32_1 = arith.constant 0 : i32
    return %c0_i32, %c0_i32_0 : i32, i32
  }
  func.func @transform_5(%arg0: i32, %arg1: i32) -> (i32, i32) {
    %c0_i32 = arith.constant 0 : i32
    %c0_i32_0 = arith.constant 0 : i32
    %c0_i32_1 = arith.constant 0 : i32
    return %c0_i32, %c0_i32_0 : i32, i32
  }
  func.func @transform_6(%arg0: i32, %arg1: i32) -> (i32, i32) {
    %c0_i32 = arith.constant 0 : i32
    %c0_i32_0 = arith.constant 0 : i32
    %c0_i32_1 = arith.constant 0 : i32
    return %c0_i32, %c0_i32_0 : i32, i32
  }
  func.func @transform_7(%arg0: i32, %arg1: i32) -> (i32, i32) {
    %c0_i32 = arith.constant 0 : i32
    %c0_i32_0 = arith.constant 0 : i32
    %c0_i32_1 = arith.constant 0 : i32
    return %c0_i32, %c0_i32_0 : i32, i32
  }
  func.func @transform_8(%arg0: i32, %arg1: i32) -> (i32, i32) {
    %c0_i32 = arith.constant 0 : i32
    %c0_i32_0 = arith.constant 0 : i32
    %c0_i32_1 = arith.constant 0 : i32
    return %c0_i32, %c0_i32_0 : i32, i32
  }
  func.func @transform_9(%arg0: i32, %arg1: i32) -> (i32, i32) {
    %c0_i32 = arith.constant 0 : i32
    %c0_i32_0 = arith.constant 0 : i32
    %c0_i32_1 = arith.constant 0 : i32
    return %c0_i32, %c0_i32_0 : i32, i32
  }
  func.func @transform_10(%arg0: i32, %arg1: i32) -> (i32, i32) {
    %c0_i32 = arith.constant 0 : i32
    %c0_i32_0 = arith.constant 0 : i32
    %c0_i32_1 = arith.constant 0 : i32
    return %c0_i32, %c0_i32_0 : i32, i32
  }
  func.func @transform_11(%arg0: i32, %arg1: i32) -> (i32, i32) {
    %c0_i32 = arith.constant 0 : i32
    %c0_i32_0 = arith.constant 0 : i32
    %c0_i32_1 = arith.constant 0 : i32
    return %c0_i32, %c0_i32_0 : i32, i32
  }
  func.func @transform_12(%arg0: i32, %arg1: i32) -> (i32, i32) {
    %c0_i32 = arith.constant 0 : i32
    %c0_i32_0 = arith.constant 0 : i32
    %c0_i32_1 = arith.constant 0 : i32
    return %c0_i32, %c0_i32_0 : i32, i32
  }
  func.func @transform_13(%arg0: i32, %arg1: i32) -> (i32, i32) {
    %c0_i32 = arith.constant 0 : i32
    %c0_i32_0 = arith.constant 0 : i32
    %c0_i32_1 = arith.constant 0 : i32
    return %c0_i32, %c0_i32_0 : i32, i32
  }
  func.func @transform_14(%arg0: i32, %arg1: i32) -> (i32, i32) {
    %c0_i32 = arith.constant 0 : i32
    %c0_i32_0 = arith.constant 0 : i32
    %c0_i32_1 = arith.constant 0 : i32
    return %c0_i32, %c0_i32_0 : i32, i32
  }
  func.func @transform_15(%arg0: i32, %arg1: i32) -> (i32, i32) {
    %c0_i32 = arith.constant 0 : i32
    %c0_i32_0 = arith.constant 0 : i32
    %c0_i32_1 = arith.constant 0 : i32
    return %c0_i32, %c0_i32_0 : i32, i32
  }
  func.func @transform_16(%arg0: i32, %arg1: i32) -> (i32, i32) {
    %c0_i32 = arith.constant 0 : i32
    %c0_i32_0 = arith.constant 0 : i32
    %c0_i32_1 = arith.constant 0 : i32
    return %c0_i32, %c0_i32_0 : i32, i32
  }
  func.func @transform_17(%arg0: i32, %arg1: i32) -> (i32, i32) {
    %c0_i32 = arith.constant 0 : i32
    %c0_i32_0 = arith.constant 0 : i32
    return %c0_i32, %arg1 : i32, i32
  }
  func.func @transform_18(%arg0: i32, %arg1: i32) -> (i32, i32) {
    %c0_i32 = arith.constant 0 : i32
    %c0_i32_0 = arith.constant 0 : i32
    return %c0_i32, %arg1 : i32, i32
  }
  func.func @transform_19(%arg0: i32, %arg1: i32) -> (i32, i32) {
    %c0_i32 = arith.constant 0 : i32
    %c0_i32_0 = arith.constant 0 : i32
    return %arg0, %c0_i32 : i32, i32
  }
  func.func @transform_20(%arg0: i32, %arg1: i32) -> (i32, i32) {
    %c0_i32 = arith.constant 0 : i32
    %c0_i32_0 = arith.constant 0 : i32
    return %arg0, %c0_i32 : i32, i32
  }
  func.func @transform_21(%arg0: i32, %arg1: i32) -> (i32, i32) {
    %c0_i32 = arith.constant 0 : i32
    %c0_i32_0 = arith.constant 0 : i32
    return %arg0, %c0_i32 : i32, i32
  }
  func.func @transform_22(%arg0: i32, %arg1: i32) -> (i32, i32) {
    %c0_i32 = arith.constant 0 : i32
    %c0_i32_0 = arith.constant 0 : i32
    return %arg0, %c0_i32 : i32, i32
  }
  func.func @transform_23(%arg0: i32, %arg1: i32) -> (i32, i32) {
    %c0_i32 = arith.constant 0 : i32
    %c0_i32_0 = arith.constant 0 : i32
    return %arg0, %c0_i32 : i32, i32
  }
  func.func @transform_24(%arg0: i32, %arg1: i32) -> (i32, i32) {
    %c0_i32 = arith.constant 0 : i32
    %c0_i32_0 = arith.constant 0 : i32
    return %arg0, %c0_i32 : i32, i32
  }
}

</mosaic_0001>

<llo_original>
// kernel: tpu_custom_call.1
$region0: #{tpu_custom_call.1}
  #allocation0 [shape = 'u32[]', space=smem, size = 0x4, offset = 0x4, fixed_abs, tag = 'smem constant byte address 0x4 - core index']
  #allocation1 [shape = 'u32[144,128]{1,0:T(1,128)}', space=vmem, size = 0x12000, scoped, tag = 'internal scratch']
  #allocation2 [shape = 'bf16[8,128]{1,0:T(8,128)(2,1)}', space=vmem, size = 0x800, scoped, tag = 'scratch operand']
  %s0 = inlined_call_operand.hbm [shape: bf16[8,128], index: 0, kind: input, shape index: {}]
  %s1 = inlined_call_operand.hbm [shape: bf16[128,128], index: 1, kind: input, shape index: {}]
  %s2 = inlined_call_operand.vmem [shape: f32[1,128], index: 2, kind: input, shape index: {}]
  %s3 = inlined_call_operand.hbm [shape: bf16[128,128], index: 3, kind: input, shape index: {}]
  %s4 = inlined_call_operand.hbm [shape: f32[1,128], index: 4, kind: input, shape index: {}]
  %s5 = inlined_call_operand.hbm [shape: bf16[128,128], index: 5, kind: input, shape index: {}]
  %s6 = inlined_call_operand.hbm [shape: f32[1,128], index: 6, kind: input, shape index: {}]
  %s7 = inlined_call_operand.hbm [shape: bf16[128,128], index: 7, kind: input, shape index: {}]
  %s8 = inlined_call_operand.hbm [shape: f32[1,128], index: 8, kind: input, shape index: {}]
  %s9 = inlined_call_operand.hbm [shape: bf16[128,128], index: 9, kind: input, shape index: {}]
  %s10 = inlined_call_operand.hbm [shape: f32[1,128], index: 10, kind: input, shape index: {}]
  %s11 = inlined_call_operand.hbm [shape: bf16[128,128], index: 11, kind: input, shape index: {}]
  %s12 = inlined_call_operand.hbm [shape: f32[1,128], index: 12, kind: input, shape index: {}]
  %s13 = inlined_call_operand.hbm [shape: bf16[128,128], index: 13, kind: input, shape index: {}]
  %s14 = inlined_call_operand.hbm [shape: f32[1,128], index: 14, kind: input, shape index: {}]
  %s15 = inlined_call_operand.vmem [shape: bf16[128,128], index: 15, kind: input, shape index: {}]
  %s16 = inlined_call_operand.vmem [shape: f32[1,128], index: 16, kind: input, shape index: {}]
  %s17 = inlined_call_operand.hbm [shape: bf16[128,384], index: 17, kind: input, shape index: {}]
  %s18 = inlined_call_operand.vmem [shape: f32[1,384], index: 18, kind: input, shape index: {}]
  %s19 = inlined_call_operand.vmem [shape: f32[8,1], index: 19, kind: input, shape index: {}]
  %s20 = inlined_call_operand.hbm [shape: f32[8,128], index: 20, kind: output, shape index: {0}]
  %s21 = inlined_call_operand.hbm [shape: f32[8,128], index: 21, kind: output, shape index: {1}]
  %s22 = inlined_call_operand.hbm [shape: f32[8,128], index: 22, kind: output, shape index: {2}]
  %s23 = inlined_call_operand.hbm [shape: f32[8,128], index: 23, kind: output, shape index: {3}]
  %s24 = inlined_call_operand.hbm [shape: f32[8,128], index: 24, kind: output, shape index: {4}]
  %25 = xla_tuple %s20, %s21, %s22, %s23, %s24
  %s26 = sld [smem:[#allocation0]]
  $region221: #{tpu_custom_call.1} parent=0
    _
  %s28 = ssub.s32 1, %s26
  %s29 = scalar_select 0, %s28, %s26
  $region1: #{tpu_custom_call.1} parent=0
    #allocation3 [shape = 'u8[2048]{0}', space=vmem, size = 0x800, scoped, tag = 'input window, operand 0, single buffered']
    #allocation4 [shape = 's32[2]{0}', space=sflag, size = 0x8, scoped, tag = 'scoped memory for tpu_custom_call.1']
    #allocation5 [shape = 's32[2]{0}', space=sflag, size = 0x8, scoped, tag = 'scoped memory for tpu_custom_call.1']
    #allocation6 [shape = 'u8[32768]{0}', space=vmem, size = 0x8000, scoped, tag = 'input window, operand 1, single buffered']
    #allocation7 [shape = 's32[1]{0}', space=sflag, size = 0x4, scoped, tag = 'scoped memory for tpu_custom_call.1']
    #allocation8 [shape = 'u8[32768]{0}', space=vmem, size = 0x8000, scoped, tag = 'input window, operand 3, single buffered']
    #allocation9 [shape = 'u8[512]{0}', space=vmem, size = 0x400, scoped, tag = 'input window, operand 4, single buffered']
    #allocation10 [shape = 's32[1]{0}', space=sflag, size = 0x4, scoped, tag = 'scoped memory for tpu_custom_call.1']
    #allocation11 [shape = 'u8[32768]{0}', space=vmem, size = 0x8000, scoped, tag = 'input window, operand 5, single buffered']
    #allocation12 [shape = 'u8[512]{0}', space=vmem, size = 0x400, scoped, tag = 'input window, operand 6, single buffered']
    #allocation13 [shape = 's32[1]{0}', space=sflag, size = 0x4, scoped, tag = 'scoped memory for tpu_custom_call.1']
    #allocation14 [shape = 'u8[32768]{0}', space=vmem, size = 0x8000, scoped, tag = 'input window, operand 7, single buffered']
    #allocation15 [shape = 'u8[512]{0}', space=vmem, size = 0x400, scoped, tag = 'input window, operand 8, single buffered']
    #allocation16 [shape = 's32[1]{0}', space=sflag, size = 0x4, scoped, tag = 'scoped memory for tpu_custom_call.1']
    #allocation17 [shape = 'u8[32768]{0}', space=vmem, size = 0x8000, scoped, tag = 'input window, operand 9, single buffered']
    #allocation18 [shape = 'u8[512]{0}', space=vmem, size = 0x400, scoped, tag = 'input window, operand 10, single buffered']
    #allocation19 [shape = 's32[1]{0}', space=sflag, size = 0x4, scoped, tag = 'scoped memory for tpu_custom_call.1']
    #allocation20 [shape = 'u8[32768]{0}', space=vmem, size = 0x8000, scoped, tag = 'input window, operand 11, single buffered']
    #allocation21 [shape = 'u8[512]{0}', space=vmem, size = 0x400, scoped, tag = 'input window, operand 12, single buffered']
    #allocation22 [shape = 's32[1]{0}', space=sflag, size = 0x4, scoped, tag = 'scoped memory for tpu_custom_call.1']
    #allocation23 [shape = 'u8[32768]{0}', space=vmem, size = 0x8000, scoped, tag = 'input window, operand 13, single buffered']
    #allocation24 [shape = 'u8[512]{0}', space=vmem, size = 0x400, scoped, tag = 'input window, operand 14, single buffered']
    #allocation25 [shape = 's32[1]{0}', space=sflag, size = 0x4, scoped, tag = 'scoped memory for tpu_custom_call.1']
    #allocation26 [shape = 'u8[65536]{0}', space=vmem, size = 0x10000, scoped, tag = 'input window, operand 17']
    #allocation27 [shape = 'u8[4096]{0}', space=vmem, size = 0x1000, scoped, tag = 'output window, operand 0, single buffered']
    #allocation28 [shape = 'u8[4096]{0}', space=vmem, size = 0x1000, scoped, tag = 'output window, operand 1, single buffered']
    #allocation29 [shape = 's32[1]{0}', space=sflag, size = 0x4, scoped, tag = 'scoped memory for tpu_custom_call.1']
    #allocation30 [shape = 'u8[4096]{0}', space=vmem, size = 0x1000, scoped, tag = 'output window, operand 2, single buffered']
    #allocation31 [shape = 'u8[4096]{0}', space=vmem, size = 0x1000, scoped, tag = 'output window, operand 3, single buffered']
    #allocation32 [shape = 's32[1]{0}', space=sflag, size = 0x4, scoped, tag = 'scoped memory for tpu_custom_call.1']
    #allocation33 [shape = 'u8[4096]{0}', space=vmem, size = 0x1000, scoped, tag = 'output window, operand 4, single buffered']
    %30 = vsyncpa [#allocation4], 0
    %31 = vsyncpa [#allocation7], 0
    %32 = vsyncpa [#allocation10], 0
    %33 = vsyncpa [#allocation13], 0
    %34 = vsyncpa [#allocation16], 0
    %35 = vsyncpa [#allocation19], 0
    %36 = vsyncpa [#allocation22], 0
    %37 = vsyncpa [#allocation25], 0
    %38 = vsyncpa [#allocation5], 0
    %39 = vsyncpa [#allocation29], 0
    %40 = vsyncpa [#allocation32], 0
    loop: start=0, step=1, limit=5
    $region2: #{tpu_custom_call.1} parent=1 // loop_pre_header
      _
    $region3: #{tpu_custom_call.1} parent=1 // loop_header
      %s42 = sphi 0, %s46
      %p43 = scmp.ge.s32.totalorder %s42, 5
      %s49 = sphi 0, %s61
      %s50 = sphi 0, %s57
      %s51 = sphi 0, %s49
      %s52 = sphi 0, %s50
      %s53 = sphi 0, %s51
      %s54 = sphi 0, %s52
      %s64 = sphi 0, %s66
      %s67 = sphi 0, %s64
      %s68 = sphi 0, %s67
      %s84 = sphi 0, %s68
      %s88 = sphi 0, %s88
      %s90 = sphi 0, %s88
      %s91 = sphi 0, %s90
      %s105 = sphi 0, %s91
      %s109 = sphi 0, %s109
      %s111 = sphi 0, %s109
      %s112 = sphi 0, %s111
      %s126 = sphi 0, %s112
      %s130 = sphi 0, %s130
      %s132 = sphi 0, %s130
      %s133 = sphi 0, %s132
      %s147 = sphi 0, %s133
      %s151 = sphi 0, %s151
      %s153 = sphi 0, %s151
      %s154 = sphi 0, %s153
      %s168 = sphi 0, %s154
      %s172 = sphi 0, %s172
      %s174 = sphi 0, %s172
      %s175 = sphi 0, %s174
      %s189 = sphi 0, %s175
      %s193 = sphi 0, %s193
      %s195 = sphi 0, %s193
      %s196 = sphi 0, %s195
      %s210 = sphi 0, %s196
      %s214 = sphi 0, %s214
      %s216 = sphi 0, %s214
      %s217 = sphi 0, %s216
      %s231 = sphi 0, %s217
      %s235 = sphi 0, %s235
      %s237 = sphi 0, %s235
      %s238 = sphi 0, %s237
      %s252 = sphi 0, %s238
      %s256 = sphi 0, %s256
      %s258 = sphi 0, %s256
      %s259 = sphi 0, %s258
      %s273 = sphi 0, %s259
      %s277 = sphi 0, %s277
      %s279 = sphi 0, %s277
      %s280 = sphi 0, %s279
      %s294 = sphi 0, %s280
      %s298 = sphi 0, %s298
      %s300 = sphi 0, %s298
      %s301 = sphi 0, %s300
      %s315 = sphi 0, %s301
      %s319 = sphi 0, %s319
      %s321 = sphi 0, %s319
      %s322 = sphi 0, %s321
      %s336 = sphi 0, %s322
      %s340 = sphi 0, %s340
      %s342 = sphi 0, %s340
      %s343 = sphi 0, %s342
      %s357 = sphi 0, %s343
      %s361 = sphi 0, %s361
      %s363 = sphi 0, %s361
      %s364 = sphi 0, %s363
      %s378 = sphi 0, %s364
      %s382 = sphi 0, %s382
      %s384 = sphi 0, %s382
      %s385 = sphi 0, %s384
      %s399 = sphi 0, %s385
      %s403 = sphi 0, %s403
      %s405 = sphi 0, %s403
      %s406 = sphi 0, %s405
      %s420 = sphi 0, %s406
      %s426 = sphi 0, %s428
      %s429 = sphi 0, %s426
      %s430 = sphi 0, %s429
      %s446 = sphi 0, %s430
      %s452 = sphi 0, %s454
      %s455 = sphi 0, %s452
      %s456 = sphi 0, %s455
      %s472 = sphi 0, %s456
      %s478 = sphi 0, %s480
      %s481 = sphi 0, %s478
      %s482 = sphi 0, %s481
      %s498 = sphi 0, %s482
      %s504 = sphi 0, %s506
      %s507 = sphi 0, %s504
      %s508 = sphi 0, %s507
      %s524 = sphi 0, %s508
      %s530 = sphi 0, %s532
      %s533 = sphi 0, %s530
      %s534 = sphi 0, %s533
      %s550 = sphi 0, %s534
      %s556 = sphi 0, %s558
      %s559 = sphi 0, %s556
      %s560 = sphi 0, %s559
      %s576 = sphi 0, %s560
      %s582 = sphi 0, %s584
      %s585 = sphi 0, %s582
      %s586 = sphi 0, %s585
      %s602 = sphi 0, %s586
      %s608 = sphi 0, %s610
      %s611 = sphi 0, %s608
      %s612 = sphi 0, %s611
      %s628 = sphi 0, %s612
    $region4: #{tpu_custom_call.1} parent=1 // loop_header_branch
      %45 = sbr.rel (%p43) target = $region8
    $region5: #{tpu_custom_call.1} parent=1 // loop_body
      %s47 = ssub.s32 %s42, 1
      %s48 = ssub.s32 %s42, 2
      %s55 = sadd.s32 1, %s50
      %p56 = scmp.ge.s32.totalorder %s55, 3
      %s57 = scalar_select %p56, 0, %s55
      %s58 = sadd.s32 1, %s49
      %s59 = scalar_select %p56, %s58, %s49
      %p60 = scmp.ge.s32.totalorder %s59, 1
      %s61 = scalar_select %p60, 0, %s59
      %s62 = ssub.s32 %s49, %s61
      %p63 = scmp.eq.s32.totalorder %s62, 0
      %s65 = sadd.s32 %s64, 1
      %s66 = scalar_select %p63, %s64, %s65
      %p69 = pneg %p63
      %p70 = scmp.eq.s32.totalorder %s42, 2
      %p71 = por %p69, %p70
      %p72 = scmp.ne.s32.totalorder %s64, %s67
      %p73 = scmp.eq.s32.totalorder %s42, 0
      %p74 = por %p72, %p73
      %p75 = scmp.ne.s32.totalorder %s64, %s67
      %p76 = scmp.eq.s32.totalorder %s47, 2
      %p77 = por %p75, %p76
      %p78 = scmp.ne.s32.totalorder %s67, %s68
      %p79 = scmp.eq.s32.totalorder %s47, 0
      %p80 = por %p78, %p79
      %p81 = scmp.ne.s32.totalorder %s67, %s68
      %p82 = scmp.eq.s32.totalorder %s48, 2
      %p83 = por %p81, %p82
      %p85 = scmp.ne.s32.totalorder %s68, %s84
      %p86 = scmp.eq.s32.totalorder %s48, 0
      %p87 = por %p85, %p86
      %s89 = sadd.s32 %s88, 1
      %p92 = scmp.eq.s32.totalorder %s42, 2
      %p93 = scmp.ne.s32.totalorder %s88, %s90
      %p94 = scmp.eq.s32.totalorder %s42, 0
      %p95 = por %p93, %p94
      %p96 = scmp.ne.s32.totalorder %s88, %s90
      %p97 = scmp.eq.s32.totalorder %s47, 2
      %p98 = por %p96, %p97
      %p99 = scmp.ne.s32.totalorder %s90, %s91
      %p100 = scmp.eq.s32.totalorder %s47, 0
      %p101 = por %p99, %p100
      %p102 = scmp.ne.s32.totalorder %s90, %s91
      %p103 = scmp.eq.s32.totalorder %s48, 2
      %p104 = por %p102, %p103
      %p106 = scmp.ne.s32.totalorder %s91, %s105
      %p107 = scmp.eq.s32.totalorder %s48, 0
      %p108 = por %p106, %p107
      %s110 = sadd.s32 %s109, 1
      %p113 = scmp.eq.s32.totalorder %s42, 2
      %p114 = scmp.ne.s32.totalorder %s109, %s111
      %p115 = scmp.eq.s32.totalorder %s42, 0
      %p116 = por %p114, %p115
      %p117 = scmp.ne.s32.totalorder %s109, %s111
      %p118 = scmp.eq.s32.totalorder %s47, 2
      %p119 = por %p117, %p118
      %p120 = scmp.ne.s32.totalorder %s111, %s112
      %p121 = scmp.eq.s32.totalorder %s47, 0
      %p122 = por %p120, %p121
      %p123 = scmp.ne.s32.totalorder %s111, %s112
      %p124 = scmp.eq.s32.totalorder %s48, 2
      %p125 = por %p123, %p124
      %p127 = scmp.ne.s32.totalorder %s112, %s126
      %p128 = scmp.eq.s32.totalorder %s48, 0
      %p129 = por %p127, %p128
      %s131 = sadd.s32 %s130, 1
      %p134 = scmp.eq.s32.totalorder %s42, 2
      %p135 = scmp.ne.s32.totalorder %s130, %s132
      %p136 = scmp.eq.s32.totalorder %s42, 0
      %p137 = por %p135, %p136
      %p138 = scmp.ne.s32.totalorder %s130, %s132
      %p139 = scmp.eq.s32.totalorder %s47, 2
      %p140 = por %p138, %p139
      %p141 = scmp.ne.s32.totalorder %s132, %s133
      %p142 = scmp.eq.s32.totalorder %s47, 0
      %p143 = por %p141, %p142
      %p144 = scmp.ne.s32.totalorder %s132, %s133
      %p145 = scmp.eq.s32.totalorder %s48, 2
      %p146 = por %p144, %p145
      %p148 = scmp.ne.s32.totalorder %s133, %s147
      %p149 = scmp.eq.s32.totalorder %s48, 0
      %p150 = por %p148, %p149
      %s152 = sadd.s32 %s151, 1
      %p155 = scmp.eq.s32.totalorder %s42, 2
      %p156 = scmp.ne.s32.totalorder %s151, %s153
      %p157 = scmp.eq.s32.totalorder %s42, 0
      %p158 = por %p156, %p157
      %p159 = scmp.ne.s32.totalorder %s151, %s153
      %p160 = scmp.eq.s32.totalorder %s47, 2
      %p161 = por %p159, %p160
      %p162 = scmp.ne.s32.totalorder %s153, %s154
      %p163 = scmp.eq.s32.totalorder %s47, 0
      %p164 = por %p162, %p163
      %p165 = scmp.ne.s32.totalorder %s153, %s154
      %p166 = scmp.eq.s32.totalorder %s48, 2
      %p167 = por %p165, %p166
      %p169 = scmp.ne.s32.totalorder %s154, %s168
      %p170 = scmp.eq.s32.totalorder %s48, 0
      %p171 = por %p169, %p170
      %s173 = sadd.s32 %s172, 1
      %p176 = scmp.eq.s32.totalorder %s42, 2
      %p177 = scmp.ne.s32.totalorder %s172, %s174
      %p178 = scmp.eq.s32.totalorder %s42, 0
      %p179 = por %p177, %p178
      %p180 = scmp.ne.s32.totalorder %s172, %s174
      %p181 = scmp.eq.s32.totalorder %s47, 2
      %p182 = por %p180, %p181
      %p183 = scmp.ne.s32.totalorder %s174, %s175
      %p184 = scmp.eq.s32.totalorder %s47, 0
      %p185 = por %p183, %p184
      %p186 = scmp.ne.s32.totalorder %s174, %s175
      %p187 = scmp.eq.s32.totalorder %s48, 2
      %p188 = por %p186, %p187
      %p190 = scmp.ne.s32.totalorder %s175, %s189
      %p191 = scmp.eq.s32.totalorder %s48, 0
      %p192 = por %p190, %p191
      %s194 = sadd.s32 %s193, 1
      %p197 = scmp.eq.s32.totalorder %s42, 2
      %p198 = scmp.ne.s32.totalorder %s193, %s195
      %p199 = scmp.eq.s32.totalorder %s42, 0
      %p200 = por %p198, %p199
      %p201 = scmp.ne.s32.totalorder %s193, %s195
      %p202 = scmp.eq.s32.totalorder %s47, 2
      %p203 = por %p201, %p202
      %p204 = scmp.ne.s32.totalorder %s195, %s196
      %p205 = scmp.eq.s32.totalorder %s47, 0
      %p206 = por %p204, %p205
      %p207 = scmp.ne.s32.totalorder %s195, %s196
      %p208 = scmp.eq.s32.totalorder %s48, 2
      %p209 = por %p207, %p208
      %p211 = scmp.ne.s32.totalorder %s196, %s210
      %p212 = scmp.eq.s32.totalorder %s48, 0
      %p213 = por %p211, %p212
      %s215 = sadd.s32 %s214, 1
      %p218 = scmp.eq.s32.totalorder %s42, 2
      %p219 = scmp.ne.s32.totalorder %s214, %s216
      %p220 = scmp.eq.s32.totalorder %s42, 0
      %p221 = por %p219, %p220
      %p222 = scmp.ne.s32.totalorder %s214, %s216
      %p223 = scmp.eq.s32.totalorder %s47, 2
      %p224 = por %p222, %p223
      %p225 = scmp.ne.s32.totalorder %s216, %s217
      %p226 = scmp.eq.s32.totalorder %s47, 0
      %p227 = por %p225, %p226
      %p228 = scmp.ne.s32.totalorder %s216, %s217
      %p229 = scmp.eq.s32.totalorder %s48, 2
      %p230 = por %p228, %p229
      %p232 = scmp.ne.s32.totalorder %s217, %s231
      %p233 = scmp.eq.s32.totalorder %s48, 0
      %p234 = por %p232, %p233
      %s236 = sadd.s32 %s235, 1
      %p239 = scmp.eq.s32.totalorder %s42, 2
      %p240 = scmp.ne.s32.totalorder %s235, %s237
      %p241 = scmp.eq.s32.totalorder %s42, 0
      %p242 = por %p240, %p241
      %p243 = scmp.ne.s32.totalorder %s235, %s237
      %p244 = scmp.eq.s32.totalorder %s47, 2
      %p245 = por %p243, %p244
      %p246 = scmp.ne.s32.totalorder %s237, %s238
      %p247 = scmp.eq.s32.totalorder %s47, 0
      %p248 = por %p246, %p247
      %p249 = scmp.ne.s32.totalorder %s237, %s238
      %p250 = scmp.eq.s32.totalorder %s48, 2
      %p251 = por %p249, %p250
      %p253 = scmp.ne.s32.totalorder %s238, %s252
      %p254 = scmp.eq.s32.totalorder %s48, 0
      %p255 = por %p253, %p254
      %s257 = sadd.s32 %s256, 1
      %p260 = scmp.eq.s32.totalorder %s42, 2
      %p261 = scmp.ne.s32.totalorder %s256, %s258
      %p262 = scmp.eq.s32.totalorder %s42, 0
      %p263 = por %p261, %p262
      %p264 = scmp.ne.s32.totalorder %s256, %s258
      %p265 = scmp.eq.s32.totalorder %s47, 2
      %p266 = por %p264, %p265
      %p267 = scmp.ne.s32.totalorder %s258, %s259
      %p268 = scmp.eq.s32.totalorder %s47, 0
      %p269 = por %p267, %p268
      %p270 = scmp.ne.s32.totalorder %s258, %s259
      %p271 = scmp.eq.s32.totalorder %s48, 2
      %p272 = por %p270, %p271
      %p274 = scmp.ne.s32.totalorder %s259, %s273
      %p275 = scmp.eq.s32.totalorder %s48, 0
      %p276 = por %p274, %p275
      %s278 = sadd.s32 %s277, 1
      %p281 = scmp.eq.s32.totalorder %s42, 2
      %p282 = scmp.ne.s32.totalorder %s277, %s279
      %p283 = scmp.eq.s32.totalorder %s42, 0
      %p284 = por %p282, %p283
      %p285 = scmp.ne.s32.totalorder %s277, %s279
      %p286 = scmp.eq.s32.totalorder %s47, 2
      %p287 = por %p285, %p286
      %p288 = scmp.ne.s32.totalorder %s279, %s280
      %p289 = scmp.eq.s32.totalorder %s47, 0
      %p290 = por %p288, %p289
      %p291 = scmp.ne.s32.totalorder %s279, %s280
      %p292 = scmp.eq.s32.totalorder %s48, 2
      %p293 = por %p291, %p292
      %p295 = scmp.ne.s32.totalorder %s280, %s294
      %p296 = scmp.eq.s32.totalorder %s48, 0
      %p297 = por %p295, %p296
      %s299 = sadd.s32 %s298, 1
      %p302 = scmp.eq.s32.totalorder %s42, 2
      %p303 = scmp.ne.s32.totalorder %s298, %s300
      %p304 = scmp.eq.s32.totalorder %s42, 0
      %p305 = por %p303, %p304
      %p306 = scmp.ne.s32.totalorder %s298, %s300
      %p307 = scmp.eq.s32.totalorder %s47, 2
      %p308 = por %p306, %p307
      %p309 = scmp.ne.s32.totalorder %s300, %s301
      %p310 = scmp.eq.s32.totalorder %s47, 0
      %p311 = por %p309, %p310
      %p312 = scmp.ne.s32.totalorder %s300, %s301
      %p313 = scmp.eq.s32.totalorder %s48, 2
      %p314 = por %p312, %p313
      %p316 = scmp.ne.s32.totalorder %s301, %s315
      %p317 = scmp.eq.s32.totalorder %s48, 0
      %p318 = por %p316, %p317
      %s320 = sadd.s32 %s319, 1
      %p323 = scmp.eq.s32.totalorder %s42, 2
      %p324 = scmp.ne.s32.totalorder %s319, %s321
      %p325 = scmp.eq.s32.totalorder %s42, 0
      %p326 = por %p324, %p325
      %p327 = scmp.ne.s32.totalorder %s319, %s321
      %p328 = scmp.eq.s32.totalorder %s47, 2
      %p329 = por %p327, %p328
      %p330 = scmp.ne.s32.totalorder %s321, %s322
      %p331 = scmp.eq.s32.totalorder %s47, 0
      %p332 = por %p330, %p331
      %p333 = scmp.ne.s32.totalorder %s321, %s322
      %p334 = scmp.eq.s32.totalorder %s48, 2
      %p335 = por %p333, %p334
      %p337 = scmp.ne.s32.totalorder %s322, %s336
      %p338 = scmp.eq.s32.totalorder %s48, 0
      %p339 = por %p337, %p338
      %s341 = sadd.s32 %s340, 1
      %p344 = scmp.eq.s32.totalorder %s42, 2
      %p345 = scmp.ne.s32.totalorder %s340, %s342
      %p346 = scmp.eq.s32.totalorder %s42, 0
      %p347 = por %p345, %p346
      %p348 = scmp.ne.s32.totalorder %s340, %s342
      %p349 = scmp.eq.s32.totalorder %s47, 2
      %p350 = por %p348, %p349
      %p351 = scmp.ne.s32.totalorder %s342, %s343
      %p352 = scmp.eq.s32.totalorder %s47, 0
      %p353 = por %p351, %p352
      %p354 = scmp.ne.s32.totalorder %s342, %s343
      %p355 = scmp.eq.s32.totalorder %s48, 2
      %p356 = por %p354, %p355
      %p358 = scmp.ne.s32.totalorder %s343, %s357
      %p359 = scmp.eq.s32.totalorder %s48, 0
      %p360 = por %p358, %p359
      %s362 = sadd.s32 %s361, 1
      %p365 = scmp.eq.s32.totalorder %s42, 2
      %p366 = scmp.ne.s32.totalorder %s361, %s363
      %p367 = scmp.eq.s32.totalorder %s42, 0
      %p368 = por %p366, %p367
      %p369 = scmp.ne.s32.totalorder %s361, %s363
      %p370 = scmp.eq.s32.totalorder %s47, 2
      %p371 = por %p369, %p370
      %p372 = scmp.ne.s32.totalorder %s363, %s364
      %p373 = scmp.eq.s32.totalorder %s47, 0
      %p374 = por %p372, %p373
      %p375 = scmp.ne.s32.totalorder %s363, %s364
      %p376 = scmp.eq.s32.totalorder %s48, 2
      %p377 = por %p375, %p376
      %p379 = scmp.ne.s32.totalorder %s364, %s378
      %p380 = scmp.eq.s32.totalorder %s48, 0
      %p381 = por %p379, %p380
      %s383 = sadd.s32 %s382, 1
      %p386 = scmp.eq.s32.totalorder %s42, 2
      %p387 = scmp.ne.s32.totalorder %s382, %s384
      %p388 = scmp.eq.s32.totalorder %s42, 0
      %p389 = por %p387, %p388
      %p390 = scmp.ne.s32.totalorder %s382, %s384
      %p391 = scmp.eq.s32.totalorder %s47, 2
      %p392 = por %p390, %p391
      %p393 = scmp.ne.s32.totalorder %s384, %s385
      %p394 = scmp.eq.s32.totalorder %s47, 0
      %p395 = por %p393, %p394
      %p396 = scmp.ne.s32.totalorder %s384, %s385
      %p397 = scmp.eq.s32.totalorder %s48, 2
      %p398 = por %p396, %p397
      %p400 = scmp.ne.s32.totalorder %s385, %s399
      %p401 = scmp.eq.s32.totalorder %s48, 0
      %p402 = por %p400, %p401
      %s404 = sadd.s32 %s403, 1
      %p407 = scmp.eq.s32.totalorder %s42, 2
      %p408 = scmp.ne.s32.totalorder %s403, %s405
      %p409 = scmp.eq.s32.totalorder %s42, 0
      %p410 = por %p408, %p409
      %p411 = scmp.ne.s32.totalorder %s403, %s405
      %p412 = scmp.eq.s32.totalorder %s47, 2
      %p413 = por %p411, %p412
      %p414 = scmp.ne.s32.totalorder %s405, %s406
      %p415 = scmp.eq.s32.totalorder %s47, 0
      %p416 = por %p414, %p415
      %p417 = scmp.ne.s32.totalorder %s405, %s406
      %p418 = scmp.eq.s32.totalorder %s48, 2
      %p419 = por %p417, %p418
      %p421 = scmp.ne.s32.totalorder %s406, %s420
      %p422 = scmp.eq.s32.totalorder %s48, 0
      %p423 = por %p421, %p422
      %s424 = ssub.s32 %s50, %s57
      %p425 = scmp.eq.s32.totalorder %s424, 0
      %s427 = sadd.s32 %s426, 1
      %s428 = scalar_select %p425, %s426, %s427
      %p431 = pneg %p425
      %p432 = scmp.eq.s32.totalorder %s42, 2
      %p433 = por %p431, %p432
      %p434 = scmp.ne.s32.totalorder %s426, %s429
      %p435 = scmp.eq.s32.totalorder %s42, 0
      %p436 = por %p434, %p435
      %p437 = scmp.ne.s32.totalorder %s426, %s429
      %p438 = scmp.eq.s32.totalorder %s47, 2
      %p439 = por %p437, %p438
      %p440 = scmp.ne.s32.totalorder %s429, %s430
      %p441 = scmp.eq.s32.totalorder %s47, 0
      %p442 = por %p440, %p441
      %p443 = scmp.ne.s32.totalorder %s429, %s430
      %p444 = scmp.eq.s32.totalorder %s48, 2
      %p445 = por %p443, %p444
      %p447 = scmp.ne.s32.totalorder %s430, %s446
      %p448 = scmp.eq.s32.totalorder %s48, 0
      %p449 = por %p447, %p448
      %s450 = ssub.s32 %s50, %s57
      %p451 = scmp.eq.s32.totalorder %s450, 0
      %s453 = sadd.s32 %s452, 1
      %s454 = scalar_select %p451, %s452, %s453
      %p457 = pneg %p451
      %p458 = scmp.eq.s32.totalorder %s42, 2
      %p459 = por %p457, %p458
      %p460 = scmp.ne.s32.totalorder %s452, %s455
      %p461 = scmp.eq.s32.totalorder %s42, 0
      %p462 = por %p460, %p461
      %p463 = scmp.ne.s32.totalorder %s452, %s455
      %p464 = scmp.eq.s32.totalorder %s47, 2
      %p465 = por %p463, %p464
      %p466 = scmp.ne.s32.totalorder %s455, %s456
      %p467 = scmp.eq.s32.totalorder %s47, 0
      %p468 = por %p466, %p467
      %p469 = scmp.ne.s32.totalorder %s455, %s456
      %p470 = scmp.eq.s32.totalorder %s48, 2
      %p471 = por %p469, %p470
      %p473 = scmp.ne.s32.totalorder %s456, %s472
      %p474 = scmp.eq.s32.totalorder %s48, 0
      %p475 = por %p473, %p474
      %s476 = ssub.s32 %s49, %s61
      %p477 = scmp.eq.s32.totalorder %s476, 0
      %s479 = sadd.s32 %s478, 1
      %s480 = scalar_select %p477, %s478, %s479
      %p483 = pneg %p477
      %p484 = scmp.eq.s32.totalorder %s42, 2
      %p485 = por %p483, %p484
      %p486 = scmp.ne.s32.totalorder %s478, %s481
      %p487 = scmp.eq.s32.totalorder %s42, 0
      %p488 = por %p486, %p487
      %p489 = scmp.ne.s32.totalorder %s478, %s481
      %p490 = scmp.eq.s32.totalorder %s47, 2
      %p491 = por %p489, %p490
      %p492 = scmp.ne.s32.totalorder %s481, %s482
      %p493 = scmp.eq.s32.totalorder %s47, 0
      %p494 = por %p492, %p493
      %p495 = scmp.ne.s32.totalorder %s481, %s482
      %p496 = scmp.eq.s32.totalorder %s48, 2
      %p497 = por %p495, %p496
      %p499 = scmp.ne.s32.totalorder %s482, %s498
      %p500 = scmp.eq.s32.totalorder %s48, 0
      %p501 = por %p499, %p500
      %s502 = ssub.s32 %s49, %s61
      %p503 = scmp.eq.s32.totalorder %s502, 0
      %s505 = sadd.s32 %s504, 1
      %s506 = scalar_select %p503, %s504, %s505
      %p509 = pneg %p503
      %p510 = scmp.eq.s32.totalorder %s42, 2
      %p511 = por %p509, %p510
      %p512 = scmp.ne.s32.totalorder %s504, %s507
      %p513 = scmp.eq.s32.totalorder %s42, 0
      %p514 = por %p512, %p513
      %p515 = scmp.ne.s32.totalorder %s504, %s507
      %p516 = scmp.eq.s32.totalorder %s47, 2
      %p517 = por %p515, %p516
      %p518 = scmp.ne.s32.totalorder %s507, %s508
      %p519 = scmp.eq.s32.totalorder %s47, 0
      %p520 = por %p518, %p519
      %p521 = scmp.ne.s32.totalorder %s507, %s508
      %p522 = scmp.eq.s32.totalorder %s48, 2
      %p523 = por %p521, %p522
      %p525 = scmp.ne.s32.totalorder %s508, %s524
      %p526 = scmp.eq.s32.totalorder %s48, 0
      %p527 = por %p525, %p526
      %s528 = ssub.s32 %s49, %s61
      %p529 = scmp.eq.s32.totalorder %s528, 0
      %s531 = sadd.s32 %s530, 1
      %s532 = scalar_select %p529, %s530, %s531
      %p535 = pneg %p529
      %p536 = scmp.eq.s32.totalorder %s42, 2
      %p537 = por %p535, %p536
      %p538 = scmp.ne.s32.totalorder %s530, %s533
      %p539 = scmp.eq.s32.totalorder %s42, 0
      %p540 = por %p538, %p539
      %p541 = scmp.ne.s32.totalorder %s530, %s533
      %p542 = scmp.eq.s32.totalorder %s47, 2
      %p543 = por %p541, %p542
      %p544 = scmp.ne.s32.totalorder %s533, %s534
      %p545 = scmp.eq.s32.totalorder %s47, 0
      %p546 = por %p544, %p545
      %p547 = scmp.ne.s32.totalorder %s533, %s534
      %p548 = scmp.eq.s32.totalorder %s48, 2
      %p549 = por %p547, %p548
      %p551 = scmp.ne.s32.totalorder %s534, %s550
      %p552 = scmp.eq.s32.totalorder %s48, 0
      %p553 = por %p551, %p552
      %s554 = ssub.s32 %s49, %s61
      %p555 = scmp.eq.s32.totalorder %s554, 0
      %s557 = sadd.s32 %s556, 1
      %s558 = scalar_select %p555, %s556, %s557
      %p561 = pneg %p555
      %p562 = scmp.eq.s32.totalorder %s42, 2
      %p563 = por %p561, %p562
      %p564 = scmp.ne.s32.totalorder %s556, %s559
      %p565 = scmp.eq.s32.totalorder %s42, 0
      %p566 = por %p564, %p565
      %p567 = scmp.ne.s32.totalorder %s556, %s559
      %p568 = scmp.eq.s32.totalorder %s47, 2
      %p569 = por %p567, %p568
      %p570 = scmp.ne.s32.totalorder %s559, %s560
      %p571 = scmp.eq.s32.totalorder %s47, 0
      %p572 = por %p570, %p571
      %p573 = scmp.ne.s32.totalorder %s559, %s560
      %p574 = scmp.eq.s32.totalorder %s48, 2
      %p575 = por %p573, %p574
      %p577 = scmp.ne.s32.totalorder %s560, %s576
      %p578 = scmp.eq.s32.totalorder %s48, 0
      %p579 = por %p577, %p578
      %s580 = ssub.s32 %s49, %s61
      %p581 = scmp.eq.s32.totalorder %s580, 0
      %s583 = sadd.s32 %s582, 1
      %s584 = scalar_select %p581, %s582, %s583
      %p587 = pneg %p581
      %p588 = scmp.eq.s32.totalorder %s42, 2
      %p589 = por %p587, %p588
      %p590 = scmp.ne.s32.totalorder %s582, %s585
      %p591 = scmp.eq.s32.totalorder %s42, 0
      %p592 = por %p590, %p591
      %p593 = scmp.ne.s32.totalorder %s582, %s585
      %p594 = scmp.eq.s32.totalorder %s47, 2
      %p595 = por %p593, %p594
      %p596 = scmp.ne.s32.totalorder %s585, %s586
      %p597 = scmp.eq.s32.totalorder %s47, 0
      %p598 = por %p596, %p597
      %p599 = scmp.ne.s32.totalorder %s585, %s586
      %p600 = scmp.eq.s32.totalorder %s48, 2
      %p601 = por %p599, %p600
      %p603 = scmp.ne.s32.totalorder %s586, %s602
      %p604 = scmp.eq.s32.totalorder %s48, 0
      %p605 = por %p603, %p604
      %s606 = ssub.s32 %s49, %s61
      %p607 = scmp.eq.s32.totalorder %s606, 0
      %s609 = sadd.s32 %s608, 1
      %s610 = scalar_select %p607, %s608, %s609
      %p613 = pneg %p607
      %p614 = scmp.eq.s32.totalorder %s42, 2
      %p615 = por %p613, %p614
      %p616 = scmp.ne.s32.totalorder %s608, %s611
      %p617 = scmp.eq.s32.totalorder %s42, 0
      %p618 = por %p616, %p617
      %p619 = scmp.ne.s32.totalorder %s608, %s611
      %p620 = scmp.eq.s32.totalorder %s47, 2
      %p621 = por %p619, %p620
      %p622 = scmp.ne.s32.totalorder %s611, %s612
      %p623 = scmp.eq.s32.totalorder %s47, 0
      %p624 = por %p622, %p623
      %p625 = scmp.ne.s32.totalorder %s611, %s612
      %p626 = scmp.eq.s32.totalorder %s48, 2
      %p627 = por %p625, %p626
      %p629 = scmp.ne.s32.totalorder %s612, %s628
      %p630 = scmp.eq.s32.totalorder %s48, 0
      %p631 = por %p629, %p630
      %p632 = scmp.le.s32.totalorder 1, %s42
      %p633 = scmp.lt.s32.totalorder %s42, 4
      %p634 = pnand %p632, %p633
      %p635 = pneg %p634
      // Predicated region
      $region9: #{tpu_custom_call.1} parent=5 // pred_check
        _
      $region10: #{tpu_custom_call.1} parent=5 // pred_check_branch
        %637 = sbr.rel (%p634) target = $region12
      $region11: #{tpu_custom_call.1} parent=5 // pred_region
        %s638 = ssub.s32 %s42, 1
        // Predicated region
        $region13: #{tpu_custom_call.1} parent=11 // pred_check
          %p639 = pneg %p80
        $region14: #{tpu_custom_call.1} parent=11 // pred_check_branch
          %641 = sbr.rel (%p639) target = $region16
        $region15: #{tpu_custom_call.1} parent=11 // pred_region
          %s643 = ssub.s32 64, 64
          %644 = vsyncadd [#allocation4], %s643
          %s645 = smul.addr %s51, 64
          %s646 = scalar_lea.hbm %s0, %s645
          %s648 = sshll.u32 [#allocation3], 4
          %s649 = int_to_ptr.vmem [resolvable:$true] %s648
          %651 = dma.hbm_to_vmem [thread:$0]  %s646, 64, %s649, [#allocation4]
        $region16: #{tpu_custom_call.1} parent=11 // pred_fallthru
          _
        // Predicated region
        $region17: #{tpu_custom_call.1} parent=11 // pred_check
          %p652 = pneg %p101
        $region18: #{tpu_custom_call.1} parent=11 // pred_check_branch
          %654 = sbr.rel (%p652) target = $region20
        $region19: #{tpu_custom_call.1} parent=11 // pred_region
          %s656 = ssub.s32 1024, 1024
          %657 = vsyncadd [#allocation7], %s656
          %s658 = sshll.u32 [#allocation6], 4
          %s659 = int_to_ptr.vmem [resolvable:$true] %s658
          %664 = dma.hbm_to_vmem [thread:$0]  %s1, 1024, %s659, [#allocation7], 64, 64, 4
        $region20: #{tpu_custom_call.1} parent=11 // pred_fallthru
          _
        // Predicated region
        $region21: #{tpu_custom_call.1} parent=11 // pred_check
          %p665 = pneg %p122
        $region22: #{tpu_custom_call.1} parent=11 // pred_check_branch
          %667 = sbr.rel (%p665) target = $region24
        $region23: #{tpu_custom_call.1} parent=11 // pred_region
          _
        $region24: #{tpu_custom_call.1} parent=11 // pred_fallthru
          _
        // Predicated region
        $region25: #{tpu_custom_call.1} parent=11 // pred_check
          %p668 = pneg %p143
        $region26: #{tpu_custom_call.1} parent=11 // pred_check_branch
          %670 = sbr.rel (%p668) target = $region28
        $region27: #{tpu_custom_call.1} parent=11 // pred_region
          %s672 = ssub.s32 1024, 1024
          %673 = vsyncadd [#allocation7], %s672
          %s674 = sshll.u32 [#allocation8], 4
          %s675 = int_to_ptr.vmem [resolvable:$true] %s674
          %680 = dma.hbm_to_vmem [thread:$0]  %s3, 1024, %s675, [#allocation7], 64, 64, 4
        $region28: #{tpu_custom_call.1} parent=11 // pred_fallthru
          _
        // Predicated region
        $region29: #{tpu_custom_call.1} parent=11 // pred_check
          %p681 = pneg %p164
        $region30: #{tpu_custom_call.1} parent=11 // pred_check_branch
          %683 = sbr.rel (%p681) target = $region32
        $region31: #{tpu_custom_call.1} parent=11 // pred_region
          %s685 = ssub.s32 16, 16
          %686 = vsyncadd [#allocation10], %s685
          %s688 = sshll.u32 [#allocation9], 4
          %s689 = int_to_ptr.vmem [resolvable:$true] %s688
          %691 = dma.hbm_to_vmem [thread:$0]  %s4, 16, %s689, [#allocation10]
        $region32: #{tpu_custom_call.1} parent=11 // pred_fallthru
          _
        // Predicated region
        $region33: #{tpu_custom_call.1} parent=11 // pred_check
          %p692 = pneg %p185
        $region34: #{tpu_custom_call.1} parent=11 // pred_check_branch
          %694 = sbr.rel (%p692) target = $region36
        $region35: #{tpu_custom_call.1} parent=11 // pred_region
          %s696 = ssub.s32 1024, 1024
          %697 = vsyncadd [#allocation10], %s696
          %s698 = sshll.u32 [#allocation11], 4
          %s699 = int_to_ptr.vmem [resolvable:$true] %s698
          %704 = dma.hbm_to_vmem [thread:$0]  %s5, 1024, %s699, [#allocation10], 64, 64, 4
        $region36: #{tpu_custom_call.1} parent=11 // pred_fallthru
          _
        // Predicated region
        $region37: #{tpu_custom_call.1} parent=11 // pred_check
          %p705 = pneg %p206
        $region38: #{tpu_custom_call.1} parent=11 // pred_check_branch
          %707 = sbr.rel (%p705) target = $region40
        $region39: #{tpu_custom_call.1} parent=11 // pred_region
          %s709 = ssub.s32 16, 16
          %710 = vsyncadd [#allocation13], %s709
          %s712 = sshll.u32 [#allocation12], 4
          %s713 = int_to_ptr.vmem [resolvable:$true] %s712
          %715 = dma.hbm_to_vmem [thread:$0]  %s6, 16, %s713, [#allocation13]
        $region40: #{tpu_custom_call.1} parent=11 // pred_fallthru
          _
        // Predicated region
        $region41: #{tpu_custom_call.1} parent=11 // pred_check
          %p716 = pneg %p227
        $region42: #{tpu_custom_call.1} parent=11 // pred_check_branch
          %718 = sbr.rel (%p716) target = $region44
        $region43: #{tpu_custom_call.1} parent=11 // pred_region
          %s720 = ssub.s32 1024, 1024
          %721 = vsyncadd [#allocation13], %s720
          %s722 = sshll.u32 [#allocation14], 4
          %s723 = int_to_ptr.vmem [resolvable:$true] %s722
          %728 = dma.hbm_to_vmem [thread:$0]  %s7, 1024, %s723, [#allocation13], 64, 64, 4
        $region44: #{tpu_custom_call.1} parent=11 // pred_fallthru
          _
        // Predicated region
        $region45: #{tpu_custom_call.1} parent=11 // pred_check
          %p729 = pneg %p248
        $region46: #{tpu_custom_call.1} parent=11 // pred_check_branch
          %731 = sbr.rel (%p729) target = $region48
        $region47: #{tpu_custom_call.1} parent=11 // pred_region
          %s733 = ssub.s32 16, 16
          %734 = vsyncadd [#allocation16], %s733
          %s736 = sshll.u32 [#allocation15], 4
          %s737 = int_to_ptr.vmem [resolvable:$true] %s736
          %739 = dma.hbm_to_vmem [thread:$0]  %s8, 16, %s737, [#allocation16]
        $region48: #{tpu_custom_call.1} parent=11 // pred_fallthru
          _
        // Predicated region
        $region49: #{tpu_custom_call.1} parent=11 // pred_check
          %p740 = pneg %p269
        $region50: #{tpu_custom_call.1} parent=11 // pred_check_branch
          %742 = sbr.rel (%p740) target = $region52
        $region51: #{tpu_custom_call.1} parent=11 // pred_region
          %s744 = ssub.s32 1024, 1024
          %745 = vsyncadd [#allocation16], %s744
          %s746 = sshll.u32 [#allocation17], 4
          %s747 = int_to_ptr.vmem [resolvable:$true] %s746
          %752 = dma.hbm_to_vmem [thread:$0]  %s9, 1024, %s747, [#allocation16], 64, 64, 4
        $region52: #{tpu_custom_call.1} parent=11 // pred_fallthru
          _
        // Predicated region
        $region53: #{tpu_custom_call.1} parent=11 // pred_check
          %p753 = pneg %p290
        $region54: #{tpu_custom_call.1} parent=11 // pred_check_branch
          %755 = sbr.rel (%p753) target = $region56
        $region55: #{tpu_custom_call.1} parent=11 // pred_region
          %s757 = ssub.s32 16, 16
          %758 = vsyncadd [#allocation19], %s757
          %s760 = sshll.u32 [#allocation18], 4
          %s761 = int_to_ptr.vmem [resolvable:$true] %s760
          %763 = dma.hbm_to_vmem [thread:$0]  %s10, 16, %s761, [#allocation19]
        $region56: #{tpu_custom_call.1} parent=11 // pred_fallthru
          _
        // Predicated region
        $region57: #{tpu_custom_call.1} parent=11 // pred_check
          %p764 = pneg %p311
        $region58: #{tpu_custom_call.1} parent=11 // pred_check_branch
          %766 = sbr.rel (%p764) target = $region60
        $region59: #{tpu_custom_call.1} parent=11 // pred_region
          %s768 = ssub.s32 1024, 1024
          %769 = vsyncadd [#allocation19], %s768
          %s770 = sshll.u32 [#allocation20], 4
          %s771 = int_to_ptr.vmem [resolvable:$true] %s770
          %776 = dma.hbm_to_vmem [thread:$0]  %s11, 1024, %s771, [#allocation19], 64, 64, 4
        $region60: #{tpu_custom_call.1} parent=11 // pred_fallthru
          _
        // Predicated region
        $region61: #{tpu_custom_call.1} parent=11 // pred_check
          %p777 = pneg %p332
        $region62: #{tpu_custom_call.1} parent=11 // pred_check_branch
          %779 = sbr.rel (%p777) target = $region64
        $region63: #{tpu_custom_call.1} parent=11 // pred_region
          %s781 = ssub.s32 16, 16
          %782 = vsyncadd [#allocation22], %s781
          %s784 = sshll.u32 [#allocation21], 4
          %s785 = int_to_ptr.vmem [resolvable:$true] %s784
          %787 = dma.hbm_to_vmem [thread:$0]  %s12, 16, %s785, [#allocation22]
        $region64: #{tpu_custom_call.1} parent=11 // pred_fallthru
          _
        // Predicated region
        $region65: #{tpu_custom_call.1} parent=11 // pred_check
          %p788 = pneg %p353
        $region66: #{tpu_custom_call.1} parent=11 // pred_check_branch
          %790 = sbr.rel (%p788) target = $region68
        $region67: #{tpu_custom_call.1} parent=11 // pred_region
          %s792 = ssub.s32 1024, 1024
          %793 = vsyncadd [#allocation22], %s792
          %s794 = sshll.u32 [#allocation23], 4
          %s795 = int_to_ptr.vmem [resolvable:$true] %s794
          %800 = dma.hbm_to_vmem [thread:$0]  %s13, 1024, %s795, [#allocation22], 64, 64, 4
        $region68: #{tpu_custom_call.1} parent=11 // pred_fallthru
          _
        // Predicated region
        $region69: #{tpu_custom_call.1} parent=11 // pred_check
          %p801 = pneg %p374
        $region70: #{tpu_custom_call.1} parent=11 // pred_check_branch
          %803 = sbr.rel (%p801) target = $region72
        $region71: #{tpu_custom_call.1} parent=11 // pred_region
          %s805 = ssub.s32 16, 16
          %806 = vsyncadd [#allocation25], %s805
          %s808 = sshll.u32 [#allocation24], 4
          %s809 = int_to_ptr.vmem [resolvable:$true] %s808
          %811 = dma.hbm_to_vmem [thread:$0]  %s14, 16, %s809, [#allocation25]
        $region72: #{tpu_custom_call.1} parent=11 // pred_fallthru
          _
        // Predicated region
        $region73: #{tpu_custom_call.1} parent=11 // pred_check
          %p812 = pneg %p395
        $region74: #{tpu_custom_call.1} parent=11 // pred_check_branch
          %814 = sbr.rel (%p812) target = $region76
        $region75: #{tpu_custom_call.1} parent=11 // pred_region
          _
        $region76: #{tpu_custom_call.1} parent=11 // pred_fallthru
          _
        // Predicated region
        $region77: #{tpu_custom_call.1} parent=11 // pred_check
          %p815 = pneg %p416
        $region78: #{tpu_custom_call.1} parent=11 // pred_check_branch
          %817 = sbr.rel (%p815) target = $region80
        $region79: #{tpu_custom_call.1} parent=11 // pred_region
          _
        $region80: #{tpu_custom_call.1} parent=11 // pred_fallthru
          _
        // Predicated region
        $region81: #{tpu_custom_call.1} parent=11 // pred_check
          %p818 = pneg %p494
        $region82: #{tpu_custom_call.1} parent=11 // pred_check_branch
          %820 = sbr.rel (%p818) target = $region84
        $region83: #{tpu_custom_call.1} parent=11 // pred_region
          %p821 = scmp.lt.s32.totalorder %s51, 0
          %s822 = scalar_select %p821, %s51, 0
          %s823 = smul.addr %s822, 8
          %s824 = scalar_lea.vmem %s19, %s823
        $region84: #{tpu_custom_call.1} parent=11 // pred_fallthru
          _
      $region12: #{tpu_custom_call.1} parent=5 // pred_fallthru
        _
      %p825 = scmp.lt.s32.totalorder %s42, 3
      // Predicated region
      $region85: #{tpu_custom_call.1} parent=5 // pred_check
        %p826 = pneg %p825
      $region86: #{tpu_custom_call.1} parent=5 // pred_check_branch
        %828 = sbr.rel (%p826) target = $region88
      $region87: #{tpu_custom_call.1} parent=5 // pred_region
        // Predicated region
        $region89: #{tpu_custom_call.1} parent=87 // pred_check
          %p829 = pneg %p436
        $region90: #{tpu_custom_call.1} parent=87 // pred_check_branch
          %831 = sbr.rel (%p829) target = $region92
        $region91: #{tpu_custom_call.1} parent=87 // pred_region
          %s832 = sand.u32 %s42, 1
          %s833 = scalar_lea.sflag [#allocation4], %s832
          %s834 = sand.u32 %s426, 1
          %s835 = smul.addr %s834, 64
          %s836 = scalar_lea.vmem [#allocation26], %s835
          %s838 = ssub.s32 1024, 1024
          %839 = vsyncadd %s833, %s838
          %s840 = smul.addr %s50, 64
          %s841 = scalar_lea.hbm %s17, %s840
          %s842 = sshll.u32 %s836, 4
          %s843 = int_to_ptr.vmem [resolvable:$true] %s842
          %848 = dma.hbm_to_vmem [thread:$0]  %s841, 1024, %s843, %s833, 192, 64, 4
        $region92: #{tpu_custom_call.1} parent=87 // pred_fallthru
          _
        // Predicated region
        $region93: #{tpu_custom_call.1} parent=87 // pred_check
          %p849 = pneg %p462
        $region94: #{tpu_custom_call.1} parent=87 // pred_check_branch
          %851 = sbr.rel (%p849) target = $region96
        $region95: #{tpu_custom_call.1} parent=87 // pred_region
          %p852 = scmp.lt.s32.totalorder %s50, 2
          %s853 = scalar_select %p852, %s50, 2
          %s854 = scalar_lea.vmem %s18, %s853
        $region96: #{tpu_custom_call.1} parent=87 // pred_fallthru
          _
      $region88: #{tpu_custom_call.1} parent=5 // pred_fallthru
        _
      %p855 = scmp.le.s32.totalorder 1, %s42
      %p856 = scmp.lt.s32.totalorder %s42, 4
      %p857 = pnand %p855, %p856
      %p858 = pneg %p857
      // Predicated region
      $region97: #{tpu_custom_call.1} parent=5 // pred_check
        _
      $region98: #{tpu_custom_call.1} parent=5 // pred_check_branch
        %860 = sbr.rel (%p857) target = $region100
      $region99: #{tpu_custom_call.1} parent=5 // pred_region
        %s861 = ssub.s32 %s42, 1
        // Predicated region
        $region101: #{tpu_custom_call.1} parent=99 // pred_check
          %p862 = pneg %p80
        $region102: #{tpu_custom_call.1} parent=99 // pred_check_branch
          %864 = sbr.rel (%p862) target = $region104
        $region103: #{tpu_custom_call.1} parent=99 // pred_region
          %865 = dma.done [#allocation4], 64
        $region104: #{tpu_custom_call.1} parent=99 // pred_fallthru
          _
        // Predicated region
        $region105: #{tpu_custom_call.1} parent=99 // pred_check
          %p866 = pneg %p101
        $region106: #{tpu_custom_call.1} parent=99 // pred_check_branch
          %868 = sbr.rel (%p866) target = $region108
        $region107: #{tpu_custom_call.1} parent=99 // pred_region
          %869 = dma.done [#allocation7], 1024
        $region108: #{tpu_custom_call.1} parent=99 // pred_fallthru
          _
        // Predicated region
        $region109: #{tpu_custom_call.1} parent=99 // pred_check
          %p870 = pneg %p143
        $region110: #{tpu_custom_call.1} parent=99 // pred_check_branch
          %872 = sbr.rel (%p870) target = $region112
        $region111: #{tpu_custom_call.1} parent=99 // pred_region
          %873 = dma.done [#allocation7], 1024
        $region112: #{tpu_custom_call.1} parent=99 // pred_fallthru
          _
        // Predicated region
        $region113: #{tpu_custom_call.1} parent=99 // pred_check
          %p874 = pneg %p164
        $region114: #{tpu_custom_call.1} parent=99 // pred_check_branch
          %876 = sbr.rel (%p874) target = $region116
        $region115: #{tpu_custom_call.1} parent=99 // pred_region
          %877 = dma.done [#allocation10], 16
        $region116: #{tpu_custom_call.1} parent=99 // pred_fallthru
          _
        // Predicated region
        $region117: #{tpu_custom_call.1} parent=99 // pred_check
          %p878 = pneg %p185
        $region118: #{tpu_custom_call.1} parent=99 // pred_check_branch
          %880 = sbr.rel (%p878) target = $region120
        $region119: #{tpu_custom_call.1} parent=99 // pred_region
          %881 = dma.done [#allocation10], 1024
        $region120: #{tpu_custom_call.1} parent=99 // pred_fallthru
          _
        // Predicated region
        $region121: #{tpu_custom_call.1} parent=99 // pred_check
          %p882 = pneg %p206
        $region122: #{tpu_custom_call.1} parent=99 // pred_check_branch
          %884 = sbr.rel (%p882) target = $region124
        $region123: #{tpu_custom_call.1} parent=99 // pred_region
          %885 = dma.done [#allocation13], 16
        $region124: #{tpu_custom_call.1} parent=99 // pred_fallthru
          _
        // Predicated region
        $region125: #{tpu_custom_call.1} parent=99 // pred_check
          %p886 = pneg %p227
        $region126: #{tpu_custom_call.1} parent=99 // pred_check_branch
          %888 = sbr.rel (%p886) target = $region128
        $region127: #{tpu_custom_call.1} parent=99 // pred_region
          %889 = dma.done [#allocation13], 1024
        $region128: #{tpu_custom_call.1} parent=99 // pred_fallthru
          _
        // Predicated region
        $region129: #{tpu_custom_call.1} parent=99 // pred_check
          %p890 = pneg %p248
        $region130: #{tpu_custom_call.1} parent=99 // pred_check_branch
          %892 = sbr.rel (%p890) target = $region132
        $region131: #{tpu_custom_call.1} parent=99 // pred_region
          %893 = dma.done [#allocation16], 16
        $region132: #{tpu_custom_call.1} parent=99 // pred_fallthru
          _
        // Predicated region
        $region133: #{tpu_custom_call.1} parent=99 // pred_check
          %p894 = pneg %p269
        $region134: #{tpu_custom_call.1} parent=99 // pred_check_branch
          %896 = sbr.rel (%p894) target = $region136
        $region135: #{tpu_custom_call.1} parent=99 // pred_region
          %897 = dma.done [#allocation16], 1024
        $region136: #{tpu_custom_call.1} parent=99 // pred_fallthru
          _
        // Predicated region
        $region137: #{tpu_custom_call.1} parent=99 // pred_check
          %p898 = pneg %p290
        $region138: #{tpu_custom_call.1} parent=99 // pred_check_branch
          %900 = sbr.rel (%p898) target = $region140
        $region139: #{tpu_custom_call.1} parent=99 // pred_region
          %901 = dma.done [#allocation19], 16
        $region140: #{tpu_custom_call.1} parent=99 // pred_fallthru
          _
        // Predicated region
        $region141: #{tpu_custom_call.1} parent=99 // pred_check
          %p902 = pneg %p311
        $region142: #{tpu_custom_call.1} parent=99 // pred_check_branch
          %904 = sbr.rel (%p902) target = $region144
        $region143: #{tpu_custom_call.1} parent=99 // pred_region
          %905 = dma.done [#allocation19], 1024
        $region144: #{tpu_custom_call.1} parent=99 // pred_fallthru
          _
        // Predicated region
        $region145: #{tpu_custom_call.1} parent=99 // pred_check
          %p906 = pneg %p332
        $region146: #{tpu_custom_call.1} parent=99 // pred_check_branch
          %908 = sbr.rel (%p906) target = $region148
        $region147: #{tpu_custom_call.1} parent=99 // pred_region
          %909 = dma.done [#allocation22], 16
        $region148: #{tpu_custom_call.1} parent=99 // pred_fallthru
          _
        // Predicated region
        $region149: #{tpu_custom_call.1} parent=99 // pred_check
          %p910 = pneg %p353
        $region150: #{tpu_custom_call.1} parent=99 // pred_check_branch
          %912 = sbr.rel (%p910) target = $region152
        $region151: #{tpu_custom_call.1} parent=99 // pred_region
          %913 = dma.done [#allocation22], 1024
        $region152: #{tpu_custom_call.1} parent=99 // pred_fallthru
          _
        // Predicated region
        $region153: #{tpu_custom_call.1} parent=99 // pred_check
          %p914 = pneg %p374
        $region154: #{tpu_custom_call.1} parent=99 // pred_check_branch
          %916 = sbr.rel (%p914) target = $region156
        $region155: #{tpu_custom_call.1} parent=99 // pred_region
          %917 = dma.done [#allocation25], 16
        $region156: #{tpu_custom_call.1} parent=99 // pred_fallthru
          _
        %s918 = sand.u32 %s47, 1
        %s919 = scalar_lea.sflag [#allocation4], %s918
        %s920 = sand.u32 %s429, 1
        %s921 = smul.addr %s920, 64
        %s922 = scalar_lea.vmem [#allocation26], %s921
        // Predicated region
        $region157: #{tpu_custom_call.1} parent=99 // pred_check
          %p923 = pneg %p442
        $region158: #{tpu_custom_call.1} parent=99 // pred_check_branch
          %925 = sbr.rel (%p923) target = $region160
        $region159: #{tpu_custom_call.1} parent=99 // pred_region
          %926 = dma.done %s919, 1024
        $region160: #{tpu_custom_call.1} parent=99 // pred_fallthru
          _
        %p927 = pneg %p80
        %p928 = pneg %p77
        %p929 = pneg %p101
        %p930 = pneg %p98
        %p931 = pneg %p122
        %p932 = pneg %p119
        %p933 = pneg %p143
        %p934 = pneg %p140
        %p935 = pneg %p164
        %p936 = pneg %p161
        %p937 = pneg %p185
        %p938 = pneg %p182
        %p939 = pneg %p206
        %p940 = pneg %p203
        %p941 = pneg %p227
        %p942 = pneg %p224
        %p943 = pneg %p248
        %p944 = pneg %p245
        %p945 = pneg %p269
        %p946 = pneg %p266
        %p947 = pneg %p290
        %p948 = pneg %p287
        %p949 = pneg %p311
        %p950 = pneg %p308
        %p951 = pneg %p332
        %p952 = pneg %p329
        %p953 = pneg %p353
        %p954 = pneg %p350
        %p955 = pneg %p374
        %p956 = pneg %p371
        %p957 = pneg %p395
        %p958 = pneg %p392
        %p959 = pneg %p416
        %p960 = pneg %p413
        %s961 = sand.u32 %s47, 1
        %s962 = scalar_lea.sflag [#allocation4], %s961
        %s963 = sand.u32 %s429, 1
        %s964 = smul.addr %s963, 64
        %s965 = scalar_lea.vmem [#allocation26], %s964
        %p966 = pneg %p442
        %p967 = pneg %p439
        %p968 = scmp.lt.s32.totalorder %s52, 2
        %s969 = scalar_select %p968, %s52, 2
        %s970 = scalar_lea.vmem %s18, %s969
        %p971 = pneg %p468
        %p972 = pneg %p465
        %p973 = scmp.lt.s32.totalorder %s51, 0
        %s974 = scalar_select %p973, %s51, 0
        %s975 = smul.addr %s974, 8
        %s976 = scalar_lea.vmem %s19, %s975
        %p977 = pneg %p494
        %p978 = pneg %p491
        %p979 = pneg %p520
        %p980 = pneg %p517
        %p981 = pneg %p546
        %p982 = pneg %p543
        %p983 = pneg %p572
        %p984 = pneg %p569
        %p985 = pneg %p598
        %p986 = pneg %p595
        %p987 = pneg %p624
        %p988 = pneg %p621
        %p989 = scmp.lt.s32.totalorder %s52, 2
        %s990 = scalar_select %p989, %s52, 2
        %s991 = scalar_lea.vmem %s18, %s990
        %p992 = scmp.lt.s32.totalorder %s51, 0
        %s993 = scalar_select %p992, %s51, 0
        %s994 = smul.addr %s993, 8
        %s995 = scalar_lea.vmem %s19, %s994
        %p997 = scmp.eq.s32.totalorder %s52, 0
        // Predicated region
        $region161: #{tpu_custom_call.1} parent=99 // pred_check
          %p998 = pneg %p997
        $region162: #{tpu_custom_call.1} parent=99 // pred_check_branch
          %1000 = sbr.rel (%p998) target = $region164
        $region163: #{tpu_custom_call.1} parent=99 // pred_region
          %v1001 = vld [vmem:[#allocation3] sm:$0xf]
          %v1002 = vld [vmem:[#allocation6] sm:$0xf]
          %v1003 = vld [vmem:[#allocation6 + $0x4] sm:$0xf]
          %v1004 = vld [vmem:[#allocation6 + $0x8] sm:$0xf]
          %v1005 = vld [vmem:[#allocation6 + $0xc] sm:$0xf]
          %v1006 = vld [vmem:[#allocation6 + $0x10] sm:$0xf]
          %v1007 = vld [vmem:[#allocation6 + $0x14] sm:$0xf]
          %v1008 = vld [vmem:[#allocation6 + $0x18] sm:$0xf]
          %v1009 = vld [vmem:[#allocation6 + $0x1c] sm:$0xf]
          %v1010 = vld [vmem:[#allocation6 + $0x20] sm:$0xf]
          %v1011 = vld [vmem:[#allocation6 + $0x24] sm:$0xf]
          %v1012 = vld [vmem:[#allocation6 + $0x28] sm:$0xf]
          %v1013 = vld [vmem:[#allocation6 + $0x2c] sm:$0xf]
          %v1014 = vld [vmem:[#allocation6 + $0x30] sm:$0xf]
          %v1015 = vld [vmem:[#allocation6 + $0x34] sm:$0xf]
          %v1016 = vld [vmem:[#allocation6 + $0x38] sm:$0xf]
          %v1017 = vld [vmem:[#allocation6 + $0x3c] sm:$0xf]
          %v1018 = vld [vmem:[%s2] sm:$0x1]
          %v1020 = vlaneseq
          %v1021 = vshrl.u32 %v1020, 7
          %v1022 = vsub.s32 0, %v1021
          %v1023 = vrot.slane %v1018, %v1022
          %v1041 = vunpack.c.l.b16 %v1002
          %v1042 = vunpack.c.l.b16 %v1003
          %v1043 = vunpack.c.l.b16 %v1004
          %v1044 = vunpack.c.l.b16 %v1005
          %v1045 = vunpack.c.l.b16 %v1006
          %v1046 = vunpack.c.l.b16 %v1007
          %v1047 = vunpack.c.l.b16 %v1008
          %v1048 = vunpack.c.l.b16 %v1009
          %v1049 = vunpack.c.l.b16 %v1010
          %v1050 = vunpack.c.l.b16 %v1011
          %v1051 = vunpack.c.l.b16 %v1012
          %v1052 = vunpack.c.l.b16 %v1013
          %v1053 = vunpack.c.l.b16 %v1014
          %v1054 = vunpack.c.l.b16 %v1015
          %v1055 = vunpack.c.l.b16 %v1016
          %v1056 = vunpack.c.l.b16 %v1017
          %v1057 = vpack.c.b16 %v1042, %v1041
          %v1058 = vpack.c.b16 %v1044, %v1043
          %v1059 = vpack.c.b16 %v1046, %v1045
          %v1060 = vpack.c.b16 %v1048, %v1047
          %v1061 = vpack.c.b16 %v1050, %v1049
          %v1062 = vpack.c.b16 %v1052, %v1051
          %v1063 = vpack.c.b16 %v1054, %v1053
          %v1064 = vpack.c.b16 %v1056, %v1055
          %1073 = vmatprep.subr.bf16.mxu0 0
          %1074 = vmatpush1.bf16.msra.mxu0 %v1057
          %1075 = vmatprep.subr.bf16.mxu0 0
          %1076 = vmatpush1.bf16.msra.mxu0 %v1058
          %1077 = vmatprep.subr.bf16.mxu0 0
          %1078 = vmatpush1.bf16.msra.mxu0 %v1059
          %1079 = vmatprep.subr.bf16.mxu0 0
          %1080 = vmatpush1.bf16.msra.mxu0 %v1060
          %1081 = vmatprep.subr.bf16.mxu0 0
          %1082 = vmatpush1.bf16.msra.mxu0 %v1061
          %1083 = vmatprep.subr.bf16.mxu0 0
          %1084 = vmatpush1.bf16.msra.mxu0 %v1062
          %1085 = vmatprep.subr.bf16.mxu0 0
          %1086 = vmatpush1.bf16.msra.mxu0 %v1063
          %1087 = vmatprep.subr.bf16.mxu0 0
          %1088 = vmatpush1.bf16.msra.mxu0 %v1064
          %1089 = vmatprep.subr.bf16.mxu0 0
          %1090 = vmatpush1.bf16.msra.mxu0 0
          %1091 = vmatprep.subr.bf16.mxu0 0
          %1092 = vmatpush1.bf16.msra.mxu0 0
          %1093 = vmatprep.subr.bf16.mxu0 0
          %1094 = vmatpush1.bf16.msra.mxu0 0
          %1095 = vmatprep.subr.bf16.mxu0 0
          %1096 = vmatpush1.bf16.msra.mxu0 0
          %1097 = vmatprep.subr.bf16.mxu0 0
          %1098 = vmatpush1.bf16.msra.mxu0 0
          %1099 = vmatprep.subr.bf16.mxu0 0
          %1100 = vmatpush1.bf16.msra.mxu0 0
          %1101 = vmatprep.subr.bf16.mxu0 0
          %1102 = vmatpush1.bf16.msra.mxu0 0
          %1103 = vmatprep.subr.bf16.mxu0 0
          %1104 = vmatpush1.bf16.msra.mxu0 0
          %1105 = vmatprep.mubr.bf16.mxu0 0
          %1106 = vmatmul.mubr.bf16.gmra.mrb[0].mxu0 %v1001
          %v1107 = vpop.f32.mrb[0].mxu0
          %v1108 = vadd.f32 %v1023, %v1107
          %v1109 = vpop.f32.mrb[0].mxu0
          %v1110 = vpop.f32.mrb[0].mxu0
          %v1111 = vpop.f32.mrb[0].mxu0
          %1112 = vdwg.mxu0
          %v1113 = vmax.f32 %v1108, 0.0
          %v1114 = vpack.c.bf16 %v1113, %v1113
          %v1115 = vld [vmem:[#allocation8] sm:$0xf]
          %v1116 = vld [vmem:[#allocation8 + $0x4] sm:$0xf]
          %v1117 = vld [vmem:[#allocation8 + $0x8] sm:$0xf]
          %v1118 = vld [vmem:[#allocation8 + $0xc] sm:$0xf]
          %v1119 = vld [vmem:[#allocation8 + $0x10] sm:$0xf]
          %v1120 = vld [vmem:[#allocation8 + $0x14] sm:$0xf]
          %v1121 = vld [vmem:[#allocation8 + $0x18] sm:$0xf]
          %v1122 = vld [vmem:[#allocation8 + $0x1c] sm:$0xf]
          %v1123 = vld [vmem:[#allocation8 + $0x20] sm:$0xf]
          %v1124 = vld [vmem:[#allocation8 + $0x24] sm:$0xf]
          %v1125 = vld [vmem:[#allocation8 + $0x28] sm:$0xf]
          %v1126 = vld [vmem:[#allocation8 + $0x2c] sm:$0xf]
          %v1127 = vld [vmem:[#allocation8 + $0x30] sm:$0xf]
          %v1128 = vld [vmem:[#allocation8 + $0x34] sm:$0xf]
          %v1129 = vld [vmem:[#allocation8 + $0x38] sm:$0xf]
          %v1130 = vld [vmem:[#allocation8 + $0x3c] sm:$0xf]
          %v1131 = vld [vmem:[#allocation9] sm:$0x1]
          %v1133 = vlaneseq
          %v1134 = vshrl.u32 %v1133, 7
          %v1135 = vsub.s32 0, %v1134
          %v1136 = vrot.slane %v1131, %v1135
          %v1154 = vunpack.c.l.b16 %v1115
          %v1155 = vunpack.c.l.b16 %v1116
          %v1156 = vunpack.c.l.b16 %v1117
          %v1157 = vunpack.c.l.b16 %v1118
          %v1158 = vunpack.c.l.b16 %v1119
          %v1159 = vunpack.c.l.b16 %v1120
          %v1160 = vunpack.c.l.b16 %v1121
          %v1161 = vunpack.c.l.b16 %v1122
          %v1162 = vunpack.c.l.b16 %v1123
          %v1163 = vunpack.c.l.b16 %v1124
          %v1164 = vunpack.c.l.b16 %v1125
          %v1165 = vunpack.c.l.b16 %v1126
          %v1166 = vunpack.c.l.b16 %v1127
          %v1167 = vunpack.c.l.b16 %v1128
          %v1168 = vunpack.c.l.b16 %v1129
          %v1169 = vunpack.c.l.b16 %v1130
          %v1170 = vpack.c.b16 %v1155, %v1154
          %v1171 = vpack.c.b16 %v1157, %v1156
          %v1172 = vpack.c.b16 %v1159, %v1158
          %v1173 = vpack.c.b16 %v1161, %v1160
          %v1174 = vpack.c.b16 %v1163, %v1162
          %v1175 = vpack.c.b16 %v1165, %v1164
          %v1176 = vpack.c.b16 %v1167, %v1166
          %v1177 = vpack.c.b16 %v1169, %v1168
          %1186 = vmatprep.subr.bf16.mxu0 0
          %1187 = vmatpush1.bf16.msra.mxu0 %v1170
          %1188 = vmatprep.subr.bf16.mxu0 0
          %1189 = vmatpush1.bf16.msra.mxu0 %v1171
          %1190 = vmatprep.subr.bf16.mxu0 0
          %1191 = vmatpush1.bf16.msra.mxu0 %v1172
          %1192 = vmatprep.subr.bf16.mxu0 0
          %1193 = vmatpush1.bf16.msra.mxu0 %v1173
          %1194 = vmatprep.subr.bf16.mxu0 0
          %1195 = vmatpush1.bf16.msra.mxu0 %v1174
          %1196 = vmatprep.subr.bf16.mxu0 0
          %1197 = vmatpush1.bf16.msra.mxu0 %v1175
          %1198 = vmatprep.subr.bf16.mxu0 0
          %1199 = vmatpush1.bf16.msra.mxu0 %v1176
          %1200 = vmatprep.subr.bf16.mxu0 0
          %1201 = vmatpush1.bf16.msra.mxu0 %v1177
          %1202 = vmatprep.subr.bf16.mxu0 0
          %1203 = vmatpush1.bf16.msra.mxu0 0
          %1204 = vmatprep.subr.bf16.mxu0 0
          %1205 = vmatpush1.bf16.msra.mxu0 0
          %1206 = vmatprep.subr.bf16.mxu0 0
          %1207 = vmatpush1.bf16.msra.mxu0 0
          %1208 = vmatprep.subr.bf16.mxu0 0
          %1209 = vmatpush1.bf16.msra.mxu0 0
          %1210 = vmatprep.subr.bf16.mxu0 0
          %1211 = vmatpush1.bf16.msra.mxu0 0
          %1212 = vmatprep.subr.bf16.mxu0 0
          %1213 = vmatpush1.bf16.msra.mxu0 0
          %1214 = vmatprep.subr.bf16.mxu0 0
          %1215 = vmatpush1.bf16.msra.mxu0 0
          %1216 = vmatprep.subr.bf16.mxu0 0
          %1217 = vmatpush1.bf16.msra.mxu0 0
          %1218 = vmatprep.mubr.bf16.mxu0 0
          %1219 = vmatmul.mubr.bf16.gmra.mrb[0].mxu0 %v1114
          %v1220 = vpop.f32.mrb[0].mxu0
          %v1221 = vadd.f32 %v1136, %v1220
          %v1222 = vpop.f32.mrb[0].mxu0
          %v1223 = vpop.f32.mrb[0].mxu0
          %v1224 = vpop.f32.mrb[0].mxu0
          %1225 = vdwg.mxu0
          %v1226 = vmax.f32 %v1221, 0.0
          %v1227 = vpack.c.bf16 %v1226, %v1226
          %v1228 = vld [vmem:[#allocation11] sm:$0xf]
          %v1229 = vld [vmem:[#allocation11 + $0x4] sm:$0xf]
          %v1230 = vld [vmem:[#allocation11 + $0x8] sm:$0xf]
          %v1231 = vld [vmem:[#allocation11 + $0xc] sm:$0xf]
          %v1232 = vld [vmem:[#allocation11 + $0x10] sm:$0xf]
          %v1233 = vld [vmem:[#allocation11 + $0x14] sm:$0xf]
          %v1234 = vld [vmem:[#allocation11 + $0x18] sm:$0xf]
          %v1235 = vld [vmem:[#allocation11 + $0x1c] sm:$0xf]
          %v1236 = vld [vmem:[#allocation11 + $0x20] sm:$0xf]
          %v1237 = vld [vmem:[#allocation11 + $0x24] sm:$0xf]
          %v1238 = vld [vmem:[#allocation11 + $0x28] sm:$0xf]
          %v1239 = vld [vmem:[#allocation11 + $0x2c] sm:$0xf]
          %v1240 = vld [vmem:[#allocation11 + $0x30] sm:$0xf]
          %v1241 = vld [vmem:[#allocation11 + $0x34] sm:$0xf]
          %v1242 = vld [vmem:[#allocation11 + $0x38] sm:$0xf]
          %v1243 = vld [vmem:[#allocation11 + $0x3c] sm:$0xf]
          %v1244 = vld [vmem:[#allocation12] sm:$0x1]
          %v1246 = vlaneseq
          %v1247 = vshrl.u32 %v1246, 7
          %v1248 = vsub.s32 0, %v1247
          %v1249 = vrot.slane %v1244, %v1248
          %v1267 = vunpack.c.l.b16 %v1228
          %v1268 = vunpack.c.l.b16 %v1229
          %v1269 = vunpack.c.l.b16 %v1230
          %v1270 = vunpack.c.l.b16 %v1231
          %v1271 = vunpack.c.l.b16 %v1232
          %v1272 = vunpack.c.l.b16 %v1233
          %v1273 = vunpack.c.l.b16 %v1234
          %v1274 = vunpack.c.l.b16 %v1235
          %v1275 = vunpack.c.l.b16 %v1236
          %v1276 = vunpack.c.l.b16 %v1237
          %v1277 = vunpack.c.l.b16 %v1238
          %v1278 = vunpack.c.l.b16 %v1239
          %v1279 = vunpack.c.l.b16 %v1240
          %v1280 = vunpack.c.l.b16 %v1241
          %v1281 = vunpack.c.l.b16 %v1242
          %v1282 = vunpack.c.l.b16 %v1243
          %v1283 = vpack.c.b16 %v1268, %v1267
          %v1284 = vpack.c.b16 %v1270, %v1269
          %v1285 = vpack.c.b16 %v1272, %v1271
          %v1286 = vpack.c.b16 %v1274, %v1273
          %v1287 = vpack.c.b16 %v1276, %v1275
          %v1288 = vpack.c.b16 %v1278, %v1277
          %v1289 = vpack.c.b16 %v1280, %v1279
          %v1290 = vpack.c.b16 %v1282, %v1281
          %1299 = vmatprep.subr.bf16.mxu0 0
          %1300 = vmatpush1.bf16.msra.mxu0 %v1283
          %1301 = vmatprep.subr.bf16.mxu0 0
          %1302 = vmatpush1.bf16.msra.mxu0 %v1284
          %1303 = vmatprep.subr.bf16.mxu0 0
          %1304 = vmatpush1.bf16.msra.mxu0 %v1285
          %1305 = vmatprep.subr.bf16.mxu0 0
          %1306 = vmatpush1.bf16.msra.mxu0 %v1286
          %1307 = vmatprep.subr.bf16.mxu0 0
          %1308 = vmatpush1.bf16.msra.mxu0 %v1287
          %1309 = vmatprep.subr.bf16.mxu0 0
          %1310 = vmatpush1.bf16.msra.mxu0 %v1288
          %1311 = vmatprep.subr.bf16.mxu0 0
          %1312 = vmatpush1.bf16.msra.mxu0 %v1289
          %1313 = vmatprep.subr.bf16.mxu0 0
          %1314 = vmatpush1.bf16.msra.mxu0 %v1290
          %1315 = vmatprep.subr.bf16.mxu0 0
          %1316 = vmatpush1.bf16.msra.mxu0 0
          %1317 = vmatprep.subr.bf16.mxu0 0
          %1318 = vmatpush1.bf16.msra.mxu0 0
          %1319 = vmatprep.subr.bf16.mxu0 0
          %1320 = vmatpush1.bf16.msra.mxu0 0
          %1321 = vmatprep.subr.bf16.mxu0 0
          %1322 = vmatpush1.bf16.msra.mxu0 0
          %1323 = vmatprep.subr.bf16.mxu0 0
          %1324 = vmatpush1.bf16.msra.mxu0 0
          %1325 = vmatprep.subr.bf16.mxu0 0
          %1326 = vmatpush1.bf16.msra.mxu0 0
          %1327 = vmatprep.subr.bf16.mxu0 0
          %1328 = vmatpush1.bf16.msra.mxu0 0
          %1329 = vmatprep.subr.bf16.mxu0 0
          %1330 = vmatpush1.bf16.msra.mxu0 0
          %1331 = vmatprep.mubr.bf16.mxu0 0
          %1332 = vmatmul.mubr.bf16.gmra.mrb[0].mxu0 %v1227
          %v1333 = vpop.f32.mrb[0].mxu0
          %v1334 = vadd.f32 %v1249, %v1333
          %v1335 = vpop.f32.mrb[0].mxu0
          %v1336 = vpop.f32.mrb[0].mxu0
          %v1337 = vpop.f32.mrb[0].mxu0
          %1338 = vdwg.mxu0
          %v1339 = vmax.f32 %v1334, 0.0
          %v1340 = vpack.c.bf16 %v1339, %v1339
          %v1341 = vld [vmem:[#allocation14] sm:$0xf]
          %v1342 = vld [vmem:[#allocation14 + $0x4] sm:$0xf]
          %v1343 = vld [vmem:[#allocation14 + $0x8] sm:$0xf]
          %v1344 = vld [vmem:[#allocation14 + $0xc] sm:$0xf]
          %v1345 = vld [vmem:[#allocation14 + $0x10] sm:$0xf]
          %v1346 = vld [vmem:[#allocation14 + $0x14] sm:$0xf]
          %v1347 = vld [vmem:[#allocation14 + $0x18] sm:$0xf]
          %v1348 = vld [vmem:[#allocation14 + $0x1c] sm:$0xf]
          %v1349 = vld [vmem:[#allocation14 + $0x20] sm:$0xf]
          %v1350 = vld [vmem:[#allocation14 + $0x24] sm:$0xf]
          %v1351 = vld [vmem:[#allocation14 + $0x28] sm:$0xf]
          %v1352 = vld [vmem:[#allocation14 + $0x2c] sm:$0xf]
          %v1353 = vld [vmem:[#allocation14 + $0x30] sm:$0xf]
          %v1354 = vld [vmem:[#allocation14 + $0x34] sm:$0xf]
          %v1355 = vld [vmem:[#allocation14 + $0x38] sm:$0xf]
          %v1356 = vld [vmem:[#allocation14 + $0x3c] sm:$0xf]
          %v1357 = vld [vmem:[#allocation15] sm:$0x1]
          %v1359 = vlaneseq
          %v1360 = vshrl.u32 %v1359, 7
          %v1361 = vsub.s32 0, %v1360
          %v1362 = vrot.slane %v1357, %v1361
          %v1380 = vunpack.c.l.b16 %v1341
          %v1381 = vunpack.c.l.b16 %v1342
          %v1382 = vunpack.c.l.b16 %v1343
          %v1383 = vunpack.c.l.b16 %v1344
          %v1384 = vunpack.c.l.b16 %v1345
          %v1385 = vunpack.c.l.b16 %v1346
          %v1386 = vunpack.c.l.b16 %v1347
          %v1387 = vunpack.c.l.b16 %v1348
          %v1388 = vunpack.c.l.b16 %v1349
          %v1389 = vunpack.c.l.b16 %v1350
          %v1390 = vunpack.c.l.b16 %v1351
          %v1391 = vunpack.c.l.b16 %v1352
          %v1392 = vunpack.c.l.b16 %v1353
          %v1393 = vunpack.c.l.b16 %v1354
          %v1394 = vunpack.c.l.b16 %v1355
          %v1395 = vunpack.c.l.b16 %v1356
          %v1396 = vpack.c.b16 %v1381, %v1380
          %v1397 = vpack.c.b16 %v1383, %v1382
          %v1398 = vpack.c.b16 %v1385, %v1384
          %v1399 = vpack.c.b16 %v1387, %v1386
          %v1400 = vpack.c.b16 %v1389, %v1388
          %v1401 = vpack.c.b16 %v1391, %v1390
          %v1402 = vpack.c.b16 %v1393, %v1392
          %v1403 = vpack.c.b16 %v1395, %v1394
          %1412 = vmatprep.subr.bf16.mxu0 0
          %1413 = vmatpush1.bf16.msra.mxu0 %v1396
          %1414 = vmatprep.subr.bf16.mxu0 0
          %1415 = vmatpush1.bf16.msra.mxu0 %v1397
          %1416 = vmatprep.subr.bf16.mxu0 0
          %1417 = vmatpush1.bf16.msra.mxu0 %v1398
          %1418 = vmatprep.subr.bf16.mxu0 0
          %1419 = vmatpush1.bf16.msra.mxu0 %v1399
          %1420 = vmatprep.subr.bf16.mxu0 0
          %1421 = vmatpush1.bf16.msra.mxu0 %v1400
          %1422 = vmatprep.subr.bf16.mxu0 0
          %1423 = vmatpush1.bf16.msra.mxu0 %v1401
          %1424 = vmatprep.subr.bf16.mxu0 0
          %1425 = vmatpush1.bf16.msra.mxu0 %v1402
          %1426 = vmatprep.subr.bf16.mxu0 0
          %1427 = vmatpush1.bf16.msra.mxu0 %v1403
          %1428 = vmatprep.subr.bf16.mxu0 0
          %1429 = vmatpush1.bf16.msra.mxu0 0
          %1430 = vmatprep.subr.bf16.mxu0 0
          %1431 = vmatpush1.bf16.msra.mxu0 0
          %1432 = vmatprep.subr.bf16.mxu0 0
          %1433 = vmatpush1.bf16.msra.mxu0 0
          %1434 = vmatprep.subr.bf16.mxu0 0
          %1435 = vmatpush1.bf16.msra.mxu0 0
          %1436 = vmatprep.subr.bf16.mxu0 0
          %1437 = vmatpush1.bf16.msra.mxu0 0
          %1438 = vmatprep.subr.bf16.mxu0 0
          %1439 = vmatpush1.bf16.msra.mxu0 0
          %1440 = vmatprep.subr.bf16.mxu0 0
          %1441 = vmatpush1.bf16.msra.mxu0 0
          %1442 = vmatprep.subr.bf16.mxu0 0
          %1443 = vmatpush1.bf16.msra.mxu0 0
          %1444 = vmatprep.mubr.bf16.mxu0 0
          %1445 = vmatmul.mubr.bf16.gmra.mrb[0].mxu0 %v1340
          %v1446 = vpop.f32.mrb[0].mxu0
          %v1447 = vadd.f32 %v1362, %v1446
          %v1448 = vpop.f32.mrb[0].mxu0
          %v1449 = vpop.f32.mrb[0].mxu0
          %v1450 = vpop.f32.mrb[0].mxu0
          %1451 = vdwg.mxu0
          %v1452 = vmax.f32 %v1447, 0.0
          %1453 = vst [vmem:[#allocation33] sm:$0xff] %v1452
          %v1454 = vpack.c.bf16 %v1452, %v1452
          %v1455 = vld [vmem:[#allocation17] sm:$0xf]
          %v1456 = vld [vmem:[#allocation17 + $0x4] sm:$0xf]
          %v1457 = vld [vmem:[#allocation17 + $0x8] sm:$0xf]
          %v1458 = vld [vmem:[#allocation17 + $0xc] sm:$0xf]
          %v1459 = vld [vmem:[#allocation17 + $0x10] sm:$0xf]
          %v1460 = vld [vmem:[#allocation17 + $0x14] sm:$0xf]
          %v1461 = vld [vmem:[#allocation17 + $0x18] sm:$0xf]
          %v1462 = vld [vmem:[#allocation17 + $0x1c] sm:$0xf]
          %v1463 = vld [vmem:[#allocation17 + $0x20] sm:$0xf]
          %v1464 = vld [vmem:[#allocation17 + $0x24] sm:$0xf]
          %v1465 = vld [vmem:[#allocation17 + $0x28] sm:$0xf]
          %v1466 = vld [vmem:[#allocation17 + $0x2c] sm:$0xf]
          %v1467 = vld [vmem:[#allocation17 + $0x30] sm:$0xf]
          %v1468 = vld [vmem:[#allocation17 + $0x34] sm:$0xf]
          %v1469 = vld [vmem:[#allocation17 + $0x38] sm:$0xf]
          %v1470 = vld [vmem:[#allocation17 + $0x3c] sm:$0xf]
          %v1471 = vld [vmem:[#allocation18] sm:$0x1]
          %v1473 = vlaneseq
          %v1474 = vshrl.u32 %v1473, 7
          %v1475 = vsub.s32 0, %v1474
          %v1476 = vrot.slane %v1471, %v1475
          %v1494 = vunpack.c.l.b16 %v1455
          %v1495 = vunpack.c.l.b16 %v1456
          %v1496 = vunpack.c.l.b16 %v1457
          %v1497 = vunpack.c.l.b16 %v1458
          %v1498 = vunpack.c.l.b16 %v1459
          %v1499 = vunpack.c.l.b16 %v1460
          %v1500 = vunpack.c.l.b16 %v1461
          %v1501 = vunpack.c.l.b16 %v1462
          %v1502 = vunpack.c.l.b16 %v1463
          %v1503 = vunpack.c.l.b16 %v1464
          %v1504 = vunpack.c.l.b16 %v1465
          %v1505 = vunpack.c.l.b16 %v1466
          %v1506 = vunpack.c.l.b16 %v1467
          %v1507 = vunpack.c.l.b16 %v1468
          %v1508 = vunpack.c.l.b16 %v1469
          %v1509 = vunpack.c.l.b16 %v1470
          %v1510 = vpack.c.b16 %v1495, %v1494
          %v1511 = vpack.c.b16 %v1497, %v1496
          %v1512 = vpack.c.b16 %v1499, %v1498
          %v1513 = vpack.c.b16 %v1501, %v1500
          %v1514 = vpack.c.b16 %v1503, %v1502
          %v1515 = vpack.c.b16 %v1505, %v1504
          %v1516 = vpack.c.b16 %v1507, %v1506
          %v1517 = vpack.c.b16 %v1509, %v1508
          %1526 = vmatprep.subr.bf16.mxu0 0
          %1527 = vmatpush1.bf16.msra.mxu0 %v1510
          %1528 = vmatprep.subr.bf16.mxu0 0
          %1529 = vmatpush1.bf16.msra.mxu0 %v1511
          %1530 = vmatprep.subr.bf16.mxu0 0
          %1531 = vmatpush1.bf16.msra.mxu0 %v1512
          %1532 = vmatprep.subr.bf16.mxu0 0
          %1533 = vmatpush1.bf16.msra.mxu0 %v1513
          %1534 = vmatprep.subr.bf16.mxu0 0
          %1535 = vmatpush1.bf16.msra.mxu0 %v1514
          %1536 = vmatprep.subr.bf16.mxu0 0
          %1537 = vmatpush1.bf16.msra.mxu0 %v1515
          %1538 = vmatprep.subr.bf16.mxu0 0
          %1539 = vmatpush1.bf16.msra.mxu0 %v1516
          %1540 = vmatprep.subr.bf16.mxu0 0
          %1541 = vmatpush1.bf16.msra.mxu0 %v1517
          %1542 = vmatprep.subr.bf16.mxu0 0
          %1543 = vmatpush1.bf16.msra.mxu0 0
          %1544 = vmatprep.subr.bf16.mxu0 0
          %1545 = vmatpush1.bf16.msra.mxu0 0
          %1546 = vmatprep.subr.bf16.mxu0 0
          %1547 = vmatpush1.bf16.msra.mxu0 0
          %1548 = vmatprep.subr.bf16.mxu0 0
          %1549 = vmatpush1.bf16.msra.mxu0 0
          %1550 = vmatprep.subr.bf16.mxu0 0
          %1551 = vmatpush1.bf16.msra.mxu0 0
          %1552 = vmatprep.subr.bf16.mxu0 0
          %1553 = vmatpush1.bf16.msra.mxu0 0
          %1554 = vmatprep.subr.bf16.mxu0 0
          %1555 = vmatpush1.bf16.msra.mxu0 0
          %1556 = vmatprep.subr.bf16.mxu0 0
          %1557 = vmatpush1.bf16.msra.mxu0 0
          %1558 = vmatprep.mubr.bf16.mxu0 0
          %1559 = vmatmul.mubr.bf16.gmra.mrb[0].mxu0 %v1454
          %v1560 = vpop.f32.mrb[0].mxu0
          %v1561 = vadd.f32 %v1476, %v1560
          %v1562 = vpop.f32.mrb[0].mxu0
          %v1563 = vpop.f32.mrb[0].mxu0
          %v1564 = vpop.f32.mrb[0].mxu0
          %1565 = vdwg.mxu0
          %v1566 = vmax.f32 %v1561, 0.0
          %v1567 = vpack.c.bf16 %v1566, %v1566
          %v1568 = vld [vmem:[#allocation20] sm:$0xf]
          %v1569 = vld [vmem:[#allocation20 + $0x4] sm:$0xf]
          %v1570 = vld [vmem:[#allocation20 + $0x8] sm:$0xf]
          %v1571 = vld [vmem:[#allocation20 + $0xc] sm:$0xf]
          %v1572 = vld [vmem:[#allocation20 + $0x10] sm:$0xf]
          %v1573 = vld [vmem:[#allocation20 + $0x14] sm:$0xf]
          %v1574 = vld [vmem:[#allocation20 + $0x18] sm:$0xf]
          %v1575 = vld [vmem:[#allocation20 + $0x1c] sm:$0xf]
          %v1576 = vld [vmem:[#allocation20 + $0x20] sm:$0xf]
          %v1577 = vld [vmem:[#allocation20 + $0x24] sm:$0xf]
          %v1578 = vld [vmem:[#allocation20 + $0x28] sm:$0xf]
          %v1579 = vld [vmem:[#allocation20 + $0x2c] sm:$0xf]
          %v1580 = vld [vmem:[#allocation20 + $0x30] sm:$0xf]
          %v1581 = vld [vmem:[#allocation20 + $0x34] sm:$0xf]
          %v1582 = vld [vmem:[#allocation20 + $0x38] sm:$0xf]
          %v1583 = vld [vmem:[#allocation20 + $0x3c] sm:$0xf]
          %v1584 = vld [vmem:[#allocation21] sm:$0x1]
          %v1586 = vlaneseq
          %v1587 = vshrl.u32 %v1586, 7
          %v1588 = vsub.s32 0, %v1587
          %v1589 = vrot.slane %v1584, %v1588
          %v1607 = vunpack.c.l.b16 %v1568
          %v1608 = vunpack.c.l.b16 %v1569
          %v1609 = vunpack.c.l.b16 %v1570
          %v1610 = vunpack.c.l.b16 %v1571
          %v1611 = vunpack.c.l.b16 %v1572
          %v1612 = vunpack.c.l.b16 %v1573
          %v1613 = vunpack.c.l.b16 %v1574
          %v1614 = vunpack.c.l.b16 %v1575
          %v1615 = vunpack.c.l.b16 %v1576
          %v1616 = vunpack.c.l.b16 %v1577
          %v1617 = vunpack.c.l.b16 %v1578
          %v1618 = vunpack.c.l.b16 %v1579
          %v1619 = vunpack.c.l.b16 %v1580
          %v1620 = vunpack.c.l.b16 %v1581
          %v1621 = vunpack.c.l.b16 %v1582
          %v1622 = vunpack.c.l.b16 %v1583
          %v1623 = vpack.c.b16 %v1608, %v1607
          %v1624 = vpack.c.b16 %v1610, %v1609
          %v1625 = vpack.c.b16 %v1612, %v1611
          %v1626 = vpack.c.b16 %v1614, %v1613
          %v1627 = vpack.c.b16 %v1616, %v1615
          %v1628 = vpack.c.b16 %v1618, %v1617
          %v1629 = vpack.c.b16 %v1620, %v1619
          %v1630 = vpack.c.b16 %v1622, %v1621
          %1639 = vmatprep.subr.bf16.mxu0 0
          %1640 = vmatpush1.bf16.msra.mxu0 %v1623
          %1641 = vmatprep.subr.bf16.mxu0 0
          %1642 = vmatpush1.bf16.msra.mxu0 %v1624
          %1643 = vmatprep.subr.bf16.mxu0 0
          %1644 = vmatpush1.bf16.msra.mxu0 %v1625
          %1645 = vmatprep.subr.bf16.mxu0 0
          %1646 = vmatpush1.bf16.msra.mxu0 %v1626
          %1647 = vmatprep.subr.bf16.mxu0 0
          %1648 = vmatpush1.bf16.msra.mxu0 %v1627
          %1649 = vmatprep.subr.bf16.mxu0 0
          %1650 = vmatpush1.bf16.msra.mxu0 %v1628
          %1651 = vmatprep.subr.bf16.mxu0 0
          %1652 = vmatpush1.bf16.msra.mxu0 %v1629
          %1653 = vmatprep.subr.bf16.mxu0 0
          %1654 = vmatpush1.bf16.msra.mxu0 %v1630
          %1655 = vmatprep.subr.bf16.mxu0 0
          %1656 = vmatpush1.bf16.msra.mxu0 0
          %1657 = vmatprep.subr.bf16.mxu0 0
          %1658 = vmatpush1.bf16.msra.mxu0 0
          %1659 = vmatprep.subr.bf16.mxu0 0
          %1660 = vmatpush1.bf16.msra.mxu0 0
          %1661 = vmatprep.subr.bf16.mxu0 0
          %1662 = vmatpush1.bf16.msra.mxu0 0
          %1663 = vmatprep.subr.bf16.mxu0 0
          %1664 = vmatpush1.bf16.msra.mxu0 0
          %1665 = vmatprep.subr.bf16.mxu0 0
          %1666 = vmatpush1.bf16.msra.mxu0 0
          %1667 = vmatprep.subr.bf16.mxu0 0
          %1668 = vmatpush1.bf16.msra.mxu0 0
          %1669 = vmatprep.subr.bf16.mxu0 0
          %1670 = vmatpush1.bf16.msra.mxu0 0
          %1671 = vmatprep.mubr.bf16.mxu0 0
          %1672 = vmatmul.mubr.bf16.gmra.mrb[0].mxu0 %v1567
          %v1673 = vpop.f32.mrb[0].mxu0
          %v1674 = vadd.f32 %v1589, %v1673
          %v1675 = vpop.f32.mrb[0].mxu0
          %v1676 = vpop.f32.mrb[0].mxu0
          %v1677 = vpop.f32.mrb[0].mxu0
          %1678 = vdwg.mxu0
          %v1679 = vmax.f32 %v1674, 0.0
          %v1680 = vpack.c.bf16 %v1679, %v1679
          %v1681 = vld [vmem:[#allocation23] sm:$0xf]
          %v1682 = vld [vmem:[#allocation23 + $0x4] sm:$0xf]
          %v1683 = vld [vmem:[#allocation23 + $0x8] sm:$0xf]
          %v1684 = vld [vmem:[#allocation23 + $0xc] sm:$0xf]
          %v1685 = vld [vmem:[#allocation23 + $0x10] sm:$0xf]
          %v1686 = vld [vmem:[#allocation23 + $0x14] sm:$0xf]
          %v1687 = vld [vmem:[#allocation23 + $0x18] sm:$0xf]
          %v1688 = vld [vmem:[#allocation23 + $0x1c] sm:$0xf]
          %v1689 = vld [vmem:[#allocation23 + $0x20] sm:$0xf]
          %v1690 = vld [vmem:[#allocation23 + $0x24] sm:$0xf]
          %v1691 = vld [vmem:[#allocation23 + $0x28] sm:$0xf]
          %v1692 = vld [vmem:[#allocation23 + $0x2c] sm:$0xf]
          %v1693 = vld [vmem:[#allocation23 + $0x30] sm:$0xf]
          %v1694 = vld [vmem:[#allocation23 + $0x34] sm:$0xf]
          %v1695 = vld [vmem:[#allocation23 + $0x38] sm:$0xf]
          %v1696 = vld [vmem:[#allocation23 + $0x3c] sm:$0xf]
          %v1697 = vld [vmem:[#allocation24] sm:$0x1]
          %v1699 = vlaneseq
          %v1700 = vshrl.u32 %v1699, 7
          %v1701 = vsub.s32 0, %v1700
          %v1702 = vrot.slane %v1697, %v1701
          %v1720 = vunpack.c.l.b16 %v1681
          %v1721 = vunpack.c.l.b16 %v1682
          %v1722 = vunpack.c.l.b16 %v1683
          %v1723 = vunpack.c.l.b16 %v1684
          %v1724 = vunpack.c.l.b16 %v1685
          %v1725 = vunpack.c.l.b16 %v1686
          %v1726 = vunpack.c.l.b16 %v1687
          %v1727 = vunpack.c.l.b16 %v1688
          %v1728 = vunpack.c.l.b16 %v1689
          %v1729 = vunpack.c.l.b16 %v1690
          %v1730 = vunpack.c.l.b16 %v1691
          %v1731 = vunpack.c.l.b16 %v1692
          %v1732 = vunpack.c.l.b16 %v1693
          %v1733 = vunpack.c.l.b16 %v1694
          %v1734 = vunpack.c.l.b16 %v1695
          %v1735 = vunpack.c.l.b16 %v1696
          %v1736 = vpack.c.b16 %v1721, %v1720
          %v1737 = vpack.c.b16 %v1723, %v1722
          %v1738 = vpack.c.b16 %v1725, %v1724
          %v1739 = vpack.c.b16 %v1727, %v1726
          %v1740 = vpack.c.b16 %v1729, %v1728
          %v1741 = vpack.c.b16 %v1731, %v1730
          %v1742 = vpack.c.b16 %v1733, %v1732
          %v1743 = vpack.c.b16 %v1735, %v1734
          %1752 = vmatprep.subr.bf16.mxu0 0
          %1753 = vmatpush1.bf16.msra.mxu0 %v1736
          %1754 = vmatprep.subr.bf16.mxu0 0
          %1755 = vmatpush1.bf16.msra.mxu0 %v1737
          %1756 = vmatprep.subr.bf16.mxu0 0
          %1757 = vmatpush1.bf16.msra.mxu0 %v1738
          %1758 = vmatprep.subr.bf16.mxu0 0
          %1759 = vmatpush1.bf16.msra.mxu0 %v1739
          %1760 = vmatprep.subr.bf16.mxu0 0
          %1761 = vmatpush1.bf16.msra.mxu0 %v1740
          %1762 = vmatprep.subr.bf16.mxu0 0
          %1763 = vmatpush1.bf16.msra.mxu0 %v1741
          %1764 = vmatprep.subr.bf16.mxu0 0
          %1765 = vmatpush1.bf16.msra.mxu0 %v1742
          %1766 = vmatprep.subr.bf16.mxu0 0
          %1767 = vmatpush1.bf16.msra.mxu0 %v1743
          %1768 = vmatprep.subr.bf16.mxu0 0
          %1769 = vmatpush1.bf16.msra.mxu0 0
          %1770 = vmatprep.subr.bf16.mxu0 0
          %1771 = vmatpush1.bf16.msra.mxu0 0
          %1772 = vmatprep.subr.bf16.mxu0 0
          %1773 = vmatpush1.bf16.msra.mxu0 0
          %1774 = vmatprep.subr.bf16.mxu0 0
          %1775 = vmatpush1.bf16.msra.mxu0 0
          %1776 = vmatprep.subr.bf16.mxu0 0
          %1777 = vmatpush1.bf16.msra.mxu0 0
          %1778 = vmatprep.subr.bf16.mxu0 0
          %1779 = vmatpush1.bf16.msra.mxu0 0
          %1780 = vmatprep.subr.bf16.mxu0 0
          %1781 = vmatpush1.bf16.msra.mxu0 0
          %1782 = vmatprep.subr.bf16.mxu0 0
          %1783 = vmatpush1.bf16.msra.mxu0 0
          %1784 = vmatprep.mubr.bf16.mxu0 0
          %1785 = vmatmul.mubr.bf16.gmra.mrb[0].mxu0 %v1680
          %v1786 = vpop.f32.mrb[0].mxu0
          %v1787 = vadd.f32 %v1702, %v1786
          %v1788 = vpop.f32.mrb[0].mxu0
          %v1789 = vpop.f32.mrb[0].mxu0
          %v1790 = vpop.f32.mrb[0].mxu0
          %1791 = vdwg.mxu0
          %v1792 = vmax.f32 %v1787, 0.0
          %v1793 = vpack.c.bf16 %v1792, %v1792
          %v1794 = vld [vmem:[%s15] sm:$0xf]
          %v1795 = vld [vmem:[%s15 + $0x4] sm:$0xf]
          %v1796 = vld [vmem:[%s15 + $0x8] sm:$0xf]
          %v1797 = vld [vmem:[%s15 + $0xc] sm:$0xf]
          %v1798 = vld [vmem:[%s15 + $0x10] sm:$0xf]
          %v1799 = vld [vmem:[%s15 + $0x14] sm:$0xf]
          %v1800 = vld [vmem:[%s15 + $0x18] sm:$0xf]
          %v1801 = vld [vmem:[%s15 + $0x1c] sm:$0xf]
          %v1802 = vld [vmem:[%s15 + $0x20] sm:$0xf]
          %v1803 = vld [vmem:[%s15 + $0x24] sm:$0xf]
          %v1804 = vld [vmem:[%s15 + $0x28] sm:$0xf]
          %v1805 = vld [vmem:[%s15 + $0x2c] sm:$0xf]
          %v1806 = vld [vmem:[%s15 + $0x30] sm:$0xf]
          %v1807 = vld [vmem:[%s15 + $0x34] sm:$0xf]
          %v1808 = vld [vmem:[%s15 + $0x38] sm:$0xf]
          %v1809 = vld [vmem:[%s15 + $0x3c] sm:$0xf]
          %v1810 = vld [vmem:[%s16] sm:$0x1]
          %v1812 = vlaneseq
          %v1813 = vshrl.u32 %v1812, 7
          %v1814 = vsub.s32 0, %v1813
          %v1815 = vrot.slane %v1810, %v1814
          %v1833 = vunpack.c.l.b16 %v1794
          %v1834 = vunpack.c.l.b16 %v1795
          %v1835 = vunpack.c.l.b16 %v1796
          %v1836 = vunpack.c.l.b16 %v1797
          %v1837 = vunpack.c.l.b16 %v1798
          %v1838 = vunpack.c.l.b16 %v1799
          %v1839 = vunpack.c.l.b16 %v1800
          %v1840 = vunpack.c.l.b16 %v1801
          %v1841 = vunpack.c.l.b16 %v1802
          %v1842 = vunpack.c.l.b16 %v1803
          %v1843 = vunpack.c.l.b16 %v1804
          %v1844 = vunpack.c.l.b16 %v1805
          %v1845 = vunpack.c.l.b16 %v1806
          %v1846 = vunpack.c.l.b16 %v1807
          %v1847 = vunpack.c.l.b16 %v1808
          %v1848 = vunpack.c.l.b16 %v1809
          %v1849 = vpack.c.b16 %v1834, %v1833
          %v1850 = vpack.c.b16 %v1836, %v1835
          %v1851 = vpack.c.b16 %v1838, %v1837
          %v1852 = vpack.c.b16 %v1840, %v1839
          %v1853 = vpack.c.b16 %v1842, %v1841
          %v1854 = vpack.c.b16 %v1844, %v1843
          %v1855 = vpack.c.b16 %v1846, %v1845
          %v1856 = vpack.c.b16 %v1848, %v1847
          %1865 = vmatprep.subr.bf16.mxu0 0
          %1866 = vmatpush1.bf16.msra.mxu0 %v1849
          %1867 = vmatprep.subr.bf16.mxu0 0
          %1868 = vmatpush1.bf16.msra.mxu0 %v1850
          %1869 = vmatprep.subr.bf16.mxu0 0
          %1870 = vmatpush1.bf16.msra.mxu0 %v1851
          %1871 = vmatprep.subr.bf16.mxu0 0
          %1872 = vmatpush1.bf16.msra.mxu0 %v1852
          %1873 = vmatprep.subr.bf16.mxu0 0
          %1874 = vmatpush1.bf16.msra.mxu0 %v1853
          %1875 = vmatprep.subr.bf16.mxu0 0
          %1876 = vmatpush1.bf16.msra.mxu0 %v1854
          %1877 = vmatprep.subr.bf16.mxu0 0
          %1878 = vmatpush1.bf16.msra.mxu0 %v1855
          %1879 = vmatprep.subr.bf16.mxu0 0
          %1880 = vmatpush1.bf16.msra.mxu0 %v1856
          %1881 = vmatprep.subr.bf16.mxu0 0
          %1882 = vmatpush1.bf16.msra.mxu0 0
          %1883 = vmatprep.subr.bf16.mxu0 0
          %1884 = vmatpush1.bf16.msra.mxu0 0
          %1885 = vmatprep.subr.bf16.mxu0 0
          %1886 = vmatpush1.bf16.msra.mxu0 0
          %1887 = vmatprep.subr.bf16.mxu0 0
          %1888 = vmatpush1.bf16.msra.mxu0 0
          %1889 = vmatprep.subr.bf16.mxu0 0
          %1890 = vmatpush1.bf16.msra.mxu0 0
          %1891 = vmatprep.subr.bf16.mxu0 0
          %1892 = vmatpush1.bf16.msra.mxu0 0
          %1893 = vmatprep.subr.bf16.mxu0 0
          %1894 = vmatpush1.bf16.msra.mxu0 0
          %1895 = vmatprep.subr.bf16.mxu0 0
          %1896 = vmatpush1.bf16.msra.mxu0 0
          %1897 = vmatprep.mubr.bf16.mxu0 0
          %1898 = vmatmul.mubr.bf16.gmra.mrb[0].mxu0 %v1793
          %v1899 = vpop.f32.mrb[0].mxu0
          %v1900 = vadd.f32 %v1815, %v1899
          %v1901 = vpop.f32.mrb[0].mxu0
          %v1902 = vpop.f32.mrb[0].mxu0
          %v1903 = vpop.f32.mrb[0].mxu0
          %1904 = vdwg.mxu0
          %v1905 = vmax.f32 %v1900, 0.0
          %v1906 = vpack.c.bf16 %v1905, %v1905
          %1907 = vst [vmem:[#allocation2] sm:$0xf] %v1906
        $region164: #{tpu_custom_call.1} parent=99 // pred_fallthru
          _
        %v1908 = vld [vmem:[#allocation2] sm:$0xf]
        %v1909 = vld [vmem:[%s922] sm:$0xf]
        %v1910 = vld [vmem:[%s922 + $0x4] sm:$0xf]
        %v1911 = vld [vmem:[%s922 + $0x8] sm:$0xf]
        %v1912 = vld [vmem:[%s922 + $0xc] sm:$0xf]
        %v1913 = vld [vmem:[%s922 + $0x10] sm:$0xf]
        %v1914 = vld [vmem:[%s922 + $0x14] sm:$0xf]
        %v1915 = vld [vmem:[%s922 + $0x18] sm:$0xf]
        %v1916 = vld [vmem:[%s922 + $0x1c] sm:$0xf]
        %v1917 = vld [vmem:[%s922 + $0x20] sm:$0xf]
        %v1918 = vld [vmem:[%s922 + $0x24] sm:$0xf]
        %v1919 = vld [vmem:[%s922 + $0x28] sm:$0xf]
        %v1920 = vld [vmem:[%s922 + $0x2c] sm:$0xf]
        %v1921 = vld [vmem:[%s922 + $0x30] sm:$0xf]
        %v1922 = vld [vmem:[%s922 + $0x34] sm:$0xf]
        %v1923 = vld [vmem:[%s922 + $0x38] sm:$0xf]
        %v1924 = vld [vmem:[%s922 + $0x3c] sm:$0xf]
        %v1925 = vld [vmem:[%s991] sm:$0x1]
        %v1927 = vlaneseq
        %v1928 = vshrl.u32 %v1927, 7
        %v1929 = vsub.s32 0, %v1928
        %v1930 = vrot.slane %v1925, %v1929
        %v1948 = vunpack.c.l.b16 %v1909
        %v1949 = vunpack.c.l.b16 %v1910
        %v1950 = vunpack.c.l.b16 %v1911
        %v1951 = vunpack.c.l.b16 %v1912
        %v1952 = vunpack.c.l.b16 %v1913
        %v1953 = vunpack.c.l.b16 %v1914
        %v1954 = vunpack.c.l.b16 %v1915
        %v1955 = vunpack.c.l.b16 %v1916
        %v1956 = vunpack.c.l.b16 %v1917
        %v1957 = vunpack.c.l.b16 %v1918
        %v1958 = vunpack.c.l.b16 %v1919
        %v1959 = vunpack.c.l.b16 %v1920
        %v1960 = vunpack.c.l.b16 %v1921
        %v1961 = vunpack.c.l.b16 %v1922
        %v1962 = vunpack.c.l.b16 %v1923
        %v1963 = vunpack.c.l.b16 %v1924
        %v1964 = vpack.c.b16 %v1949, %v1948
        %v1965 = vpack.c.b16 %v1951, %v1950
        %v1966 = vpack.c.b16 %v1953, %v1952
        %v1967 = vpack.c.b16 %v1955, %v1954
        %v1968 = vpack.c.b16 %v1957, %v1956
        %v1969 = vpack.c.b16 %v1959, %v1958
        %v1970 = vpack.c.b16 %v1961, %v1960
        %v1971 = vpack.c.b16 %v1963, %v1962
        %1980 = vmatprep.subr.bf16.mxu0 0
        %1981 = vmatpush1.bf16.msra.mxu0 %v1964
        %1982 = vmatprep.subr.bf16.mxu0 0
        %1983 = vmatpush1.bf16.msra.mxu0 %v1965
        %1984 = vmatprep.subr.bf16.mxu0 0
        %1985 = vmatpush1.bf16.msra.mxu0 %v1966
        %1986 = vmatprep.subr.bf16.mxu0 0
        %1987 = vmatpush1.bf16.msra.mxu0 %v1967
        %1988 = vmatprep.subr.bf16.mxu0 0
        %1989 = vmatpush1.bf16.msra.mxu0 %v1968
        %1990 = vmatprep.subr.bf16.mxu0 0
        %1991 = vmatpush1.bf16.msra.mxu0 %v1969
        %1992 = vmatprep.subr.bf16.mxu0 0
        %1993 = vmatpush1.bf16.msra.mxu0 %v1970
        %1994 = vmatprep.subr.bf16.mxu0 0
        %1995 = vmatpush1.bf16.msra.mxu0 %v1971
        %1996 = vmatprep.subr.bf16.mxu0 0
        %1997 = vmatpush1.bf16.msra.mxu0 0
        %1998 = vmatprep.subr.bf16.mxu0 0
        %1999 = vmatpush1.bf16.msra.mxu0 0
        %2000 = vmatprep.subr.bf16.mxu0 0
        %2001 = vmatpush1.bf16.msra.mxu0 0
        %2002 = vmatprep.subr.bf16.mxu0 0
        %2003 = vmatpush1.bf16.msra.mxu0 0
        %2004 = vmatprep.subr.bf16.mxu0 0
        %2005 = vmatpush1.bf16.msra.mxu0 0
        %2006 = vmatprep.subr.bf16.mxu0 0
        %2007 = vmatpush1.bf16.msra.mxu0 0
        %2008 = vmatprep.subr.bf16.mxu0 0
        %2009 = vmatpush1.bf16.msra.mxu0 0
        %2010 = vmatprep.subr.bf16.mxu0 0
        %2011 = vmatpush1.bf16.msra.mxu0 0
        %2012 = vmatprep.mubr.bf16.mxu0 0
        %2013 = vmatmul.mubr.bf16.gmra.mrb[0].mxu0 %v1908
        %v2014 = vpop.f32.mrb[0].mxu0
        %v2015 = vadd.f32 %v1930, %v2014
        %v2016 = vpop.f32.mrb[0].mxu0
        %v2017 = vpop.f32.mrb[0].mxu0
        %v2018 = vpop.f32.mrb[0].mxu0
        %2019 = vdwg.mxu0
        // Predicated region
        $region165: #{tpu_custom_call.1} parent=99 // pred_check
          %p2020 = pneg %p997
        $region166: #{tpu_custom_call.1} parent=99 // pred_check_branch
          %2022 = sbr.rel (%p2020) target = $region168
        $region167: #{tpu_custom_call.1} parent=99 // pred_region
          %v2023 = vxor.u32 %v2015, 2147483648
          %v2024 = vmul.f32 %v2023, 1.442695
          %v2025 = vpow.pop %v2024
          %v2026 = vadd.f32 %v2025, 1.0
          %v2027 = vrcp.pop %v2026
          %v2028 = vmul.f32 1.0, %v2027
          %v2029 = vxor.u32 %v2028, 2147483648
          %v2030 = vmul.f32 %v2029, 1.442695
          %v2031 = vpow.pop %v2030
          %v2032 = vadd.f32 %v2031, 1.0
          %v2033 = vrcp.pop %v2032
          %v2034 = vmul.f32 1.0, %v2033
          %2035 = vst [vmem:[#allocation28] sm:$0xff] %v2034
        $region168: #{tpu_custom_call.1} parent=99 // pred_fallthru
          _
        %p2036 = scmp.eq.s32.totalorder %s52, 1
        // Predicated region
        $region169: #{tpu_custom_call.1} parent=99 // pred_check
          %p2037 = pneg %p2036
        $region170: #{tpu_custom_call.1} parent=99 // pred_check_branch
          %2039 = sbr.rel (%p2037) target = $region172
        $region171: #{tpu_custom_call.1} parent=99 // pred_region
          %v2040 = vmax.f32 %v2015, 0.0001
          %v2041 = vmin.f32 %v2040, 10000.0
          %2042 = vst [vmem:[#allocation30] sm:$0xff] %v2041
        $region172: #{tpu_custom_call.1} parent=99 // pred_fallthru
          _
        %p2043 = scmp.eq.s32.totalorder %s52, 2
        // Predicated region
        $region173: #{tpu_custom_call.1} parent=99 // pred_check
          %p2044 = pneg %p2043
        $region174: #{tpu_custom_call.1} parent=99 // pred_check_branch
          %2046 = sbr.rel (%p2044) target = $region176
        $region175: #{tpu_custom_call.1} parent=99 // pred_region
          %v2047 = vmul.f32 %v2015, 1.442695
          %v2048 = vpow.pop %v2047
          %v2049 = vmax.f32 %v2048, 1e-05
          %v2050 = vmin.f32 %v2049, 1000000.0
          %2051 = vst [vmem:[#allocation31] sm:$0xff] %v2050
          %v2052 = vld [vmem:[%s995] sm:$0xff]
          %2054 = vset.pattern.permute.xlu0 0
          %2055 = vperm.xlu0 %2054, %v2052
          %v2056 = vpop.permute.xlu0 %2055
          %v2058 = vmul.f32 %v2050, %v2056
          %2059 = vst [vmem:[#allocation27] sm:$0xff] %v2058
        $region176: #{tpu_custom_call.1} parent=99 // pred_fallthru
          _
        // Predicated region
        $region177: #{tpu_custom_call.1} parent=99 // pred_check
          %p2060 = pneg %p517
        $region178: #{tpu_custom_call.1} parent=99 // pred_check_branch
          %2062 = sbr.rel (%p2060) target = $region180
        $region179: #{tpu_custom_call.1} parent=99 // pred_region
          %s2064 = ssub.s32 128, 128
          %2065 = vsyncadd [#allocation5], %s2064
          %s2066 = smul.addr %s51, 128
          %s2067 = scalar_lea.hbm %s20, %s2066
          %s2069 = sshll.u32 [#allocation27], 4
          %s2070 = int_to_ptr.vmem [resolvable:$true] %s2069
          %2072 = dma.vmem_to_hbm [thread:$0]  %s2070, 128, %s2067, [#allocation5]
        $region180: #{tpu_custom_call.1} parent=99 // pred_fallthru
          _
        // Predicated region
        $region181: #{tpu_custom_call.1} parent=99 // pred_check
          %p2073 = pneg %p543
        $region182: #{tpu_custom_call.1} parent=99 // pred_check_branch
          %2075 = sbr.rel (%p2073) target = $region184
        $region183: #{tpu_custom_call.1} parent=99 // pred_region
          %s2077 = ssub.s32 128, 128
          %2078 = vsyncadd [#allocation29], %s2077
          %s2079 = smul.addr %s51, 128
          %s2080 = scalar_lea.hbm %s21, %s2079
          %s2082 = sshll.u32 [#allocation28], 4
          %s2083 = int_to_ptr.vmem [resolvable:$true] %s2082
          %2085 = dma.vmem_to_hbm [thread:$0]  %s2083, 128, %s2080, [#allocation29]
        $region184: #{tpu_custom_call.1} parent=99 // pred_fallthru
          _
        // Predicated region
        $region185: #{tpu_custom_call.1} parent=99 // pred_check
          %p2086 = pneg %p569
        $region186: #{tpu_custom_call.1} parent=99 // pred_check_branch
          %2088 = sbr.rel (%p2086) target = $region188
        $region187: #{tpu_custom_call.1} parent=99 // pred_region
          %s2090 = ssub.s32 128, 128
          %2091 = vsyncadd [#allocation29], %s2090
          %s2092 = smul.addr %s51, 128
          %s2093 = scalar_lea.hbm %s22, %s2092
          %s2095 = sshll.u32 [#allocation30], 4
          %s2096 = int_to_ptr.vmem [resolvable:$true] %s2095
          %2098 = dma.vmem_to_hbm [thread:$0]  %s2096, 128, %s2093, [#allocation29]
        $region188: #{tpu_custom_call.1} parent=99 // pred_fallthru
          _
        // Predicated region
        $region189: #{tpu_custom_call.1} parent=99 // pred_check
          %p2099 = pneg %p595
        $region190: #{tpu_custom_call.1} parent=99 // pred_check_branch
          %2101 = sbr.rel (%p2099) target = $region192
        $region191: #{tpu_custom_call.1} parent=99 // pred_region
          %s2103 = ssub.s32 128, 128
          %2104 = vsyncadd [#allocation32], %s2103
          %s2105 = smul.addr %s51, 128
          %s2106 = scalar_lea.hbm %s23, %s2105
          %s2108 = sshll.u32 [#allocation31], 4
          %s2109 = int_to_ptr.vmem [resolvable:$true] %s2108
          %2111 = dma.vmem_to_hbm [thread:$0]  %s2109, 128, %s2106, [#allocation32]
        $region192: #{tpu_custom_call.1} parent=99 // pred_fallthru
          _
        // Predicated region
        $region193: #{tpu_custom_call.1} parent=99 // pred_check
          %p2112 = pneg %p621
        $region194: #{tpu_custom_call.1} parent=99 // pred_check_branch
          %2114 = sbr.rel (%p2112) target = $region196
        $region195: #{tpu_custom_call.1} parent=99 // pred_region
          %s2116 = ssub.s32 128, 128
          %2117 = vsyncadd [#allocation32], %s2116
          %s2118 = smul.addr %s51, 128
          %s2119 = scalar_lea.hbm %s24, %s2118
          %s2121 = sshll.u32 [#allocation33], 4
          %s2122 = int_to_ptr.vmem [resolvable:$true] %s2121
          %2124 = dma.vmem_to_hbm [thread:$0]  %s2122, 128, %s2119, [#allocation32]
        $region196: #{tpu_custom_call.1} parent=99 // pred_fallthru
          _
        // Predicated region
        $region197: #{tpu_custom_call.1} parent=99 // pred_check
          %p2125 = pneg %p517
        $region198: #{tpu_custom_call.1} parent=99 // pred_check_branch
          %2127 = sbr.rel (%p2125) target = $region200
        $region199: #{tpu_custom_call.1} parent=99 // pred_region
          %2128 = dma.done [#allocation5], 128
        $region200: #{tpu_custom_call.1} parent=99 // pred_fallthru
          _
        // Predicated region
        $region201: #{tpu_custom_call.1} parent=99 // pred_check
          %p2129 = pneg %p543
        $region202: #{tpu_custom_call.1} parent=99 // pred_check_branch
          %2131 = sbr.rel (%p2129) target = $region204
        $region203: #{tpu_custom_call.1} parent=99 // pred_region
          %2132 = dma.done [#allocation29], 128
        $region204: #{tpu_custom_call.1} parent=99 // pred_fallthru
          _
        // Predicated region
        $region205: #{tpu_custom_call.1} parent=99 // pred_check
          %p2133 = pneg %p569
        $region206: #{tpu_custom_call.1} parent=99 // pred_check_branch
          %2135 = sbr.rel (%p2133) target = $region208
        $region207: #{tpu_custom_call.1} parent=99 // pred_region
          %2136 = dma.done [#allocation29], 128
        $region208: #{tpu_custom_call.1} parent=99 // pred_fallthru
          _
        // Predicated region
        $region209: #{tpu_custom_call.1} parent=99 // pred_check
          %p2137 = pneg %p595
        $region210: #{tpu_custom_call.1} parent=99 // pred_check_branch
          %2139 = sbr.rel (%p2137) target = $region212
        $region211: #{tpu_custom_call.1} parent=99 // pred_region
          %2140 = dma.done [#allocation32], 128
        $region212: #{tpu_custom_call.1} parent=99 // pred_fallthru
          _
        // Predicated region
        $region213: #{tpu_custom_call.1} parent=99 // pred_check
          %p2141 = pneg %p621
        $region214: #{tpu_custom_call.1} parent=99 // pred_check_branch
          %2143 = sbr.rel (%p2141) target = $region216
        $region215: #{tpu_custom_call.1} parent=99 // pred_region
          %2144 = dma.done [#allocation32], 128
        $region216: #{tpu_custom_call.1} parent=99 // pred_fallthru
          _
      $region100: #{tpu_custom_call.1} parent=5 // pred_fallthru
        _
      %p2145 = scmp.le.s32.totalorder 2, %s42
      // Predicated region
      $region217: #{tpu_custom_call.1} parent=5 // pred_check
        %p2146 = pneg %p2145
      $region218: #{tpu_custom_call.1} parent=5 // pred_check_branch
        %2148 = sbr.rel (%p2146) target = $region220
      $region219: #{tpu_custom_call.1} parent=5 // pred_region
        %s2149 = ssub.s32 %s42, 2
      $region220: #{tpu_custom_call.1} parent=5 // pred_fallthru
        _
    $region6: #{tpu_custom_call.1} parent=1 // loop_footer
      %s46 = sadd.s32 1, %s42
    $region7: #{tpu_custom_call.1} parent=1 // loop_footer_branch
      %41 = sbr.rel target = $region3
    $region8: #{tpu_custom_call.1} parent=1 // loop_exit
      _
    %2150 = vsyncpa [#allocation4], 1
    %s2151 = scalar_lea.sflag [#allocation4], 1
    %2152 = vsyncpa %s2151, 1
    %2153 = vsyncpa [#allocation7], 1
    %2154 = vsyncpa [#allocation10], 1
    %2155 = vsyncpa [#allocation13], 1
    %2156 = vsyncpa [#allocation16], 1
    %2157 = vsyncpa [#allocation19], 1
    %2158 = vsyncpa [#allocation22], 1
    %2159 = vsyncpa [#allocation25], 1
    %2160 = vsyncpa [#allocation5], 1
    %s2161 = scalar_lea.sflag [#allocation5], 1
    %2162 = vsyncpa %s2161, 1
    %2163 = vsyncpa [#allocation29], 1
    %2164 = vsyncpa [#allocation32], 1

</llo_original>
